<compile_context>
chip_gen: v6e
topology: v6e:2x2x1
jax: 0.10.0
libtpu: 0.0.40
codegen_flags: <defaults>
</compile_context>

<pallas_src>
import functools
import jax
import jax.numpy as jnp
from jax.experimental import pallas as pl
from jax.experimental.pallas import tpu as pltpu


def _encoder_kernel(x_ref,
                    w1_ref, b1_ref,
                    w2_ref, b2_ref,
                    w3_ref, b3_ref,
                    w4_ref, b4_ref,
                    wh_ref, bh_ref,
                    out_ref):
    """Whole encoder forward for one batch tile, entirely in VMEM.

    Trunk: 4 x (Linear -> ReLU).  Head: single fused (mean|logvar|zero-pad) Linear,
    written as one lane-dense [tile, 128] slab.
    """
    h = x_ref[...]
    for w_ref, b_ref in ((w1_ref, b1_ref), (w2_ref, b2_ref),
                         (w3_ref, b3_ref), (w4_ref, b4_ref)):
        # Matmul in the weights' dtype (f32 or bf16); accumulate + bias + ReLU in f32.
        h = jnp.dot(h.astype(w_ref.dtype), w_ref[...],
                    preferred_element_type=jnp.float32) + b_ref[...]
        h = jnp.maximum(h, 0.0)

    out = jnp.dot(h.astype(wh_ref.dtype), wh_ref[...],
                  preferred_element_type=jnp.float32) + bh_ref[...]
    out_ref[...] = out.astype(out_ref.dtype)


def _round_up(x, m):
    return ((x + m - 1) // m) * m


def _choose_tile(B, batch_tile):
    """Pick the batch tile: clamp for small batches, and aim for >=4 grid steps
    (>=2 per v7x TensorCore) so the BlockSpec pipeline has DMAs to overlap."""
    tile = min(batch_tile, max(8, _round_up(B, 8)))     # small-batch clamp
    if B >= 32:
        tile = min(tile, max(8, _round_up((B + 3) // 4, 8)))
    return tile


def _vmem_limit_bytes(tile, input_dim, hidden_dim, head_pad,
                      mm_itemsize, out_itemsize, weight_buffers):
    """Generous VMEM estimate (bytes) for CompilerParams.vmem_limit_bytes."""
    weight_elems = (input_dim * hidden_dim + 3 * hidden_dim * hidden_dim
                    + hidden_dim * head_pad)
    w_bytes = weight_elems * mm_itemsize * weight_buffers
    b_bytes = (4 * hidden_dim + head_pad) * 4 * weight_buffers
    io_bytes = 2 * tile * input_dim * mm_itemsize + 2 * tile * head_pad * out_itemsize
    act_bytes = 4 * tile * max(hidden_dim, head_pad) * 4      # f32 intermediates, generous
    est = w_bytes + b_bytes + io_bytes + act_bytes
    return int(min(100 * 1024 * 1024, max(16 * 1024 * 1024, 2 * est)))


def prepare_params(params, use_bf16=False):
    """One-time weight prep (hoisted out of the per-call wrapper).

    Fuses the two heads into one lane-padded [hidden, 128k] matrix and casts the matmul
    operands to bf16 if requested (biases stay f32; accumulation stays f32 in-kernel).
    """
    latent_dim = params["wm"].shape[1]
    head_cols = 2 * latent_dim
    head_pad = max(128, _round_up(head_cols, 128))

    wh = jnp.concatenate([params["wm"], params["wl"]], axis=1)
    wh = jnp.pad(wh, ((0, 0), (0, head_pad - head_cols)))
    bh = jnp.concatenate([params["bm"], params["bl"]], axis=1)
    bh = jnp.pad(bh, ((0, 0), (0, head_pad - head_cols)))

    mm_dtype = jnp.bfloat16 if use_bf16 else jnp.float32
    return dict(
        w1=params["w1"].astype(mm_dtype), b1=params["b1"],
        w2=params["w2"].astype(mm_dtype), b2=params["b2"],
        w3=params["w3"].astype(mm_dtype), b3=params["b3"],
        w4=params["w4"].astype(mm_dtype), b4=params["b4"],
        wh=wh.astype(mm_dtype), bh=bh,
    )


@functools.partial(jax.jit,
                   static_argnames=("latent_dim", "batch_tile", "single_buffer_weights"))
def vae_encoder_forward(x, prep, latent_dim, batch_tile=256, single_buffer_weights=True):
    """x: [B, input_dim] float32. prep: output of prepare_params().

    Returns (mean, logvar), each [B, latent_dim] float32.
    """
    B, input_dim = x.shape
    hidden_dim = prep["w1"].shape[1]
    head_pad = prep["wh"].shape[1]
    head_cols = 2 * latent_dim
    mm_dtype = prep["w1"].dtype          # f32 or bf16 (decided once in prepare_params)
    out_dtype = mm_dtype                 # bf16 output slab halves the largest HBM stream

    # --- tile / grid ---------------------------------------------------------------------
    tile = _choose_tile(B, batch_tile)
    B_pad = _round_up(B, tile)
    x_in = x.astype(mm_dtype)
    if B_pad != B:
        x_in = jnp.pad(x_in, ((0, B_pad - B), (0, 0)))
    grid = (B_pad // tile,)

    # --- specs -----------------------------------------------------------------------------
    # Weights/biases: constant block index across the batch grid -> single-buffer them.
    wmode = pl.Buffered(1) if single_buffer_weights else None

    def rep_spec(shape):
        if wmode is None:
            return pl.BlockSpec(shape, lambda i: (0, 0))
        return pl.BlockSpec(shape, lambda i: (0, 0), pipeline_mode=wmode)

    in_specs = [
        pl.BlockSpec((tile, input_dim), lambda i: (i, 0)),                 # x
        rep_spec((input_dim, hidden_dim)), rep_spec((1, hidden_dim)),      # w1, b1
        rep_spec((hidden_dim, hidden_dim)), rep_spec((1, hidden_dim)),     # w2, b2
        rep_spec((hidden_dim, hidden_dim)), rep_spec((1, hidden_dim)),     # w3, b3
        rep_spec((hidden_dim, hidden_dim)), rep_spec((1, hidden_dim)),     # w4, b4
        rep_spec((hidden_dim, head_pad)), rep_spec((1, head_pad)),         # wh, bh (fused head)
    ]
    out_specs = pl.BlockSpec((tile, head_pad), lambda i: (i, 0))           # lane-dense slab

    vmem_limit = _vmem_limit_bytes(
        tile, input_dim, hidden_dim, head_pad,
        jnp.dtype(mm_dtype).itemsize, jnp.dtype(out_dtype).itemsize,
        1 if single_buffer_weights else 2)

    out = pl.pallas_call(
        _encoder_kernel,
        grid=grid,
        in_specs=in_specs,
        out_specs=out_specs,
        out_shape=jax.ShapeDtypeStruct((B_pad, head_pad), out_dtype),
        compiler_params=pltpu.CompilerParams(
            dimension_semantics=("parallel",),
            vmem_limit_bytes=vmem_limit),
    )(x_in, prep["w1"], prep["b1"], prep["w2"], prep["b2"], prep["w3"], prep["b3"],
      prep["w4"], prep["b4"], prep["wh"], prep["bh"])

    mean = out[:B, :latent_dim].astype(jnp.float32)
    logvar = out[:B, latent_dim:head_cols].astype(jnp.float32)
    return mean, logvar


def init_params(key, input_dim, hidden_dim, latent_dim):
    """Deterministic synthetic init (shapes match the nn.Linear layers of the module)."""
    keys = jax.random.split(key, 12)

    def lin(kw, kb, fan_in, fan_out):
        bound = 1.0 / jnp.sqrt(fan_in)
        w = jax.random.uniform(kw, (fan_in, fan_out), jnp.float32, -bound, bound)
        b = jax.random.uniform(kb, (1, fan_out), jnp.float32, -bound, bound)
        return w, b

    w1, b1 = lin(keys[0], keys[1], input_dim, hidden_dim)
    w2, b2 = lin(keys[2], keys[3], hidden_dim, hidden_dim)
    w3, b3 = lin(keys[4], keys[5], hidden_dim, hidden_dim)
    w4, b4 = lin(keys[6], keys[7], hidden_dim, hidden_dim)
    wm, bm = lin(keys[8], keys[9], hidden_dim, latent_dim)
    wl, bl = lin(keys[10], keys[11], hidden_dim, latent_dim)
    return dict(w1=w1, b1=b1, w2=w2, b2=b2, w3=w3, b3=b3, w4=w4, b4=b4,
                wm=wm, bm=bm, wl=wl, bl=bl)


def reference_forward(x, p):
    """Pure-JAX reference identical to the PyTorch forward semantics."""
    h = x
    for w, b in ((p["w1"], p["b1"]), (p["w2"], p["b2"]),
                 (p["w3"], p["b3"]), (p["w4"], p["b4"])):
        h = jnp.maximum(h @ w + b, 0.0)
    return h @ p["wm"] + p["bm"], h @ p["wl"] + p["bl"]


if __name__ == "__main__":
    input_dim, hidden_dim, latent_dim = 32, 64, 16
    batch = 512    # tile=128 -> grid=(4,): >=2 steps per v7x TensorCore, 4 on v5e/v6e

    key = jax.random.PRNGKey(0)
    k_x, k_p, k_r = jax.random.split(key, 3)
    x = jax.random.normal(k_x, (batch, input_dim), dtype=jnp.float32)
    params = init_params(k_p, input_dim, hidden_dim, latent_dim)

    # One-time weight prep (head fusion + lane padding + dtype casts) -- out of the hot path.
    prep_f32 = prepare_params(params, use_bf16=False)
    prep_bf16 = prepare_params(params, use_bf16=True)   # recommended default on v6e/v7x

    mean_ref, logvar_ref = reference_forward(x, params)

    # Probe whether this JAX build accepts single-buffered (Buffered(1)) weight blocks;
    # fall back to the default double-buffered pipeline if not.
    single_buf = True
    try:
        m0, lv0 = vae_encoder_forward(x[:8], prep_f32, latent_dim=latent_dim,
                                      single_buffer_weights=True)
        jax.block_until_ready((m0, lv0))
    except Exception:
        single_buf = False

    # f32 path: tight correctness check.
    mean, logvar = vae_encoder_forward(x, prep_f32, latent_dim=latent_dim,
                                       single_buffer_weights=single_buf)
    jax.block_until_ready((mean, logvar))
    assert mean.shape == (batch, latent_dim) and logvar.shape == (batch, latent_dim)
    assert jnp.allclose(mean, mean_ref, atol=1e-5, rtol=1e-5)
    assert jnp.allclose(logvar, logvar_ref, atol=1e-5, rtol=1e-5)

    # bf16 path (half the weight/x/output HBM bytes): bf16-appropriate tolerance.
    mean_b, logvar_b = vae_encoder_forward(x, prep_bf16, latent_dim=latent_dim,
                                           single_buffer_weights=single_buf)
    jax.block_until_ready((mean_b, logvar_b))
    assert jnp.allclose(mean_b, mean_ref, atol=3e-2, rtol=3e-2)
    assert jnp.allclose(logvar_b, logvar_ref, atol=3e-2, rtol=3e-2)

    # Ragged small batch: tile is clamped (10 -> 16 padded rows, not 256), so ~96% less
    # wasted MXU work / output writeback than before.
    x_small = jax.random.normal(k_r, (10, input_dim), dtype=jnp.float32)
    m_s, lv_s = vae_encoder_forward(x_small, prep_f32, latent_dim=latent_dim,
                                    single_buffer_weights=single_buf)
    jax.block_until_ready((m_s, lv_s))
    m_s_ref, lv_s_ref = reference_forward(x_small, params)
    assert jnp.allclose(m_s, m_s_ref, atol=1e-5, rtol=1e-5)
    assert jnp.allclose(lv_s, lv_s_ref, atol=1e-5, rtol=1e-5)

    print("KERNEL_OK")
</pallas_src>

<mosaic_0001>
module attributes {stable_mosaic.version = 11 : i64} {
  func.func @_encoder_kernel(%arg0: i32, %arg1: memref<8x32xf32, #tpu.memory_space<vmem>>, %arg2: memref<32x64xf32, #tpu.memory_space<vmem>>, %arg3: memref<1x64xf32, #tpu.memory_space<vmem>>, %arg4: memref<64x64xf32, #tpu.memory_space<vmem>>, %arg5: memref<1x64xf32, #tpu.memory_space<vmem>>, %arg6: memref<64x64xf32, #tpu.memory_space<vmem>>, %arg7: memref<1x64xf32, #tpu.memory_space<vmem>>, %arg8: memref<64x64xf32, #tpu.memory_space<vmem>>, %arg9: memref<1x64xf32, #tpu.memory_space<vmem>>, %arg10: memref<64x128xf32, #tpu.memory_space<vmem>>, %arg11: memref<1x128xf32, #tpu.memory_space<vmem>>, %arg12: memref<8x128xf32, #tpu.memory_space<vmem>>) attributes {dimension_semantics = [#tpu.dimension_semantics<parallel>], iteration_bounds = array<i64: 1>, scalar_prefetch = 0 : i64, scratch_operands = 0 : i64, tpu.core_type = #tpu.core_type<tc>, window_params = [{transform_indices = @transform_0, window_bounds = array<i64: 8, 32>}, {pipeline_mode = #tpu.pipeline_mode<synchronous>, transform_indices = @transform_1, window_bounds = array<i64: 32, 64>}, {pipeline_mode = #tpu.pipeline_mode<synchronous>, transform_indices = @transform_2, window_bounds = array<i64: 1, 64>}, {pipeline_mode = #tpu.pipeline_mode<synchronous>, transform_indices = @transform_3, window_bounds = array<i64: 64, 64>}, {pipeline_mode = #tpu.pipeline_mode<synchronous>, transform_indices = @transform_4, window_bounds = array<i64: 1, 64>}, {pipeline_mode = #tpu.pipeline_mode<synchronous>, transform_indices = @transform_5, window_bounds = array<i64: 64, 64>}, {pipeline_mode = #tpu.pipeline_mode<synchronous>, transform_indices = @transform_6, window_bounds = array<i64: 1, 64>}, {pipeline_mode = #tpu.pipeline_mode<synchronous>, transform_indices = @transform_7, window_bounds = array<i64: 64, 64>}, {pipeline_mode = #tpu.pipeline_mode<synchronous>, transform_indices = @transform_8, window_bounds = array<i64: 1, 64>}, {pipeline_mode = #tpu.pipeline_mode<synchronous>, transform_indices = @transform_9, window_bounds = array<i64: 64, 128>}, {pipeline_mode = #tpu.pipeline_mode<synchronous>, transform_indices = @transform_10, window_bounds = array<i64: 1, 128>}, {transform_indices = @transform_11, window_bounds = array<i64: 8, 128>}]} {
    %c0 = arith.constant 0 : index
    %c0_0 = arith.constant 0 : index
    %0 = vector.load %arg1[%c0, %c0_0] : memref<8x32xf32, #tpu.memory_space<vmem>>, vector<8x32xf32>
    %c0_1 = arith.constant 0 : index
    %c0_2 = arith.constant 0 : index
    %1 = vector.load %arg2[%c0_1, %c0_2] : memref<32x64xf32, #tpu.memory_space<vmem>>, vector<32x64xf32>
    %cst = arith.constant dense<0.000000e+00> : vector<8x64xf32>
    %2 = tpu.matmul %0, %1, %cst {dimension_numbers = #tpu.dot_dimension_numbers<[1], [0], [0], [1], [0, 0, 1, 1], [], []>} : vector<8x32xf32>, vector<32x64xf32>, vector<8x64xf32> -> vector<8x64xf32>
    %c0_3 = arith.constant 0 : index
    %c0_4 = arith.constant 0 : index
    %3 = vector.load %arg3[%c0_3, %c0_4] : memref<1x64xf32, #tpu.memory_space<vmem>>, vector<1x64xf32>
    %4 = vector.broadcast %3 : vector<1x64xf32> to vector<8x64xf32>
    %5 = arith.addf %2, %4 : vector<8x64xf32>
    %cst_5 = arith.constant 0.000000e+00 : f32
    %6 = vector.broadcast %cst_5 : f32 to vector<8x64xf32>
    %7 = arith.maximumf %5, %6 : vector<8x64xf32>
    %c0_6 = arith.constant 0 : index
    %c0_7 = arith.constant 0 : index
    %8 = vector.load %arg4[%c0_6, %c0_7] : memref<64x64xf32, #tpu.memory_space<vmem>>, vector<64x64xf32>
    %cst_8 = arith.constant dense<0.000000e+00> : vector<8x64xf32>
    %9 = tpu.matmul %7, %8, %cst_8 {dimension_numbers = #tpu.dot_dimension_numbers<[1], [0], [0], [1], [0, 0, 1, 1], [], []>} : vector<8x64xf32>, vector<64x64xf32>, vector<8x64xf32> -> vector<8x64xf32>
    %c0_9 = arith.constant 0 : index
    %c0_10 = arith.constant 0 : index
    %10 = vector.load %arg5[%c0_9, %c0_10] : memref<1x64xf32, #tpu.memory_space<vmem>>, vector<1x64xf32>
    %11 = vector.broadcast %10 : vector<1x64xf32> to vector<8x64xf32>
    %12 = arith.addf %9, %11 : vector<8x64xf32>
    %cst_11 = arith.constant 0.000000e+00 : f32
    %13 = vector.broadcast %cst_11 : f32 to vector<8x64xf32>
    %14 = arith.maximumf %12, %13 : vector<8x64xf32>
    %c0_12 = arith.constant 0 : index
    %c0_13 = arith.constant 0 : index
    %15 = vector.load %arg6[%c0_12, %c0_13] : memref<64x64xf32, #tpu.memory_space<vmem>>, vector<64x64xf32>
    %cst_14 = arith.constant dense<0.000000e+00> : vector<8x64xf32>
    %16 = tpu.matmul %14, %15, %cst_14 {dimension_numbers = #tpu.dot_dimension_numbers<[1], [0], [0], [1], [0, 0, 1, 1], [], []>} : vector<8x64xf32>, vector<64x64xf32>, vector<8x64xf32> -> vector<8x64xf32>
    %c0_15 = arith.constant 0 : index
    %c0_16 = arith.constant 0 : index
    %17 = vector.load %arg7[%c0_15, %c0_16] : memref<1x64xf32, #tpu.memory_space<vmem>>, vector<1x64xf32>
    %18 = vector.broadcast %17 : vector<1x64xf32> to vector<8x64xf32>
    %19 = arith.addf %16, %18 : vector<8x64xf32>
    %cst_17 = arith.constant 0.000000e+00 : f32
    %20 = vector.broadcast %cst_17 : f32 to vector<8x64xf32>
    %21 = arith.maximumf %19, %20 : vector<8x64xf32>
    %c0_18 = arith.constant 0 : index
    %c0_19 = arith.constant 0 : index
    %22 = vector.load %arg8[%c0_18, %c0_19] : memref<64x64xf32, #tpu.memory_space<vmem>>, vector<64x64xf32>
    %cst_20 = arith.constant dense<0.000000e+00> : vector<8x64xf32>
    %23 = tpu.matmul %21, %22, %cst_20 {dimension_numbers = #tpu.dot_dimension_numbers<[1], [0], [0], [1], [0, 0, 1, 1], [], []>} : vector<8x64xf32>, vector<64x64xf32>, vector<8x64xf32> -> vector<8x64xf32>
    %c0_21 = arith.constant 0 : index
    %c0_22 = arith.constant 0 : index
    %24 = vector.load %arg9[%c0_21, %c0_22] : memref<1x64xf32, #tpu.memory_space<vmem>>, vector<1x64xf32>
    %25 = vector.broadcast %24 : vector<1x64xf32> to vector<8x64xf32>
    %26 = arith.addf %23, %25 : vector<8x64xf32>
    %cst_23 = arith.constant 0.000000e+00 : f32
    %27 = vector.broadcast %cst_23 : f32 to vector<8x64xf32>
    %28 = arith.maximumf %26, %27 : vector<8x64xf32>
    %c0_24 = arith.constant 0 : index
    %c0_25 = arith.constant 0 : index
    %29 = vector.load %arg10[%c0_24, %c0_25] : memref<64x128xf32, #tpu.memory_space<vmem>>, vector<64x128xf32>
    %cst_26 = arith.constant dense<0.000000e+00> : vector<8x128xf32>
    %30 = tpu.matmul %28, %29, %cst_26 {dimension_numbers = #tpu.dot_dimension_numbers<[1], [0], [0], [1], [0, 0, 1, 1], [], []>} : vector<8x64xf32>, vector<64x128xf32>, vector<8x128xf32> -> vector<8x128xf32>
    %c0_27 = arith.constant 0 : index
    %c0_28 = arith.constant 0 : index
    %31 = vector.load %arg11[%c0_27, %c0_28] : memref<1x128xf32, #tpu.memory_space<vmem>>, vector<1x128xf32>
    %32 = vector.broadcast %31 : vector<1x128xf32> to vector<8x128xf32>
    %33 = arith.addf %30, %32 : vector<8x128xf32>
    %c0_29 = arith.constant 0 : index
    %c0_30 = arith.constant 0 : index
    %34 = vector.load %arg12[%c0_29, %c0_30] : memref<8x128xf32, #tpu.memory_space<vmem>>, vector<8x128xf32>
    tpu.vector_store %arg12[%c0_29, %c0_30], %33 {strides = array<i32>} : memref<8x128xf32, #tpu.memory_space<vmem>>, vector<8x128xf32>,
    return
  }
  func.func @transform_0(%arg0: i32) -> (i32, i32) {
    %c0_i32 = arith.constant 0 : i32
    %c0_i32_0 = arith.constant 0 : i32
    return %arg0, %c0_i32 : i32, i32
  }
  func.func @transform_1(%arg0: i32) -> (i32, i32) {
    %c0_i32 = arith.constant 0 : i32
    %c0_i32_0 = arith.constant 0 : i32
    %c0_i32_1 = arith.constant 0 : i32
    return %c0_i32, %c0_i32_0 : i32, i32
  }
  func.func @transform_2(%arg0: i32) -> (i32, i32) {
    %c0_i32 = arith.constant 0 : i32
    %c0_i32_0 = arith.constant 0 : i32
    %c0_i32_1 = arith.constant 0 : i32
    return %c0_i32, %c0_i32_0 : i32, i32
  }
  func.func @transform_3(%arg0: i32) -> (i32, i32) {
    %c0_i32 = arith.constant 0 : i32
    %c0_i32_0 = arith.constant 0 : i32
    %c0_i32_1 = arith.constant 0 : i32
    return %c0_i32, %c0_i32_0 : i32, i32
  }
  func.func @transform_4(%arg0: i32) -> (i32, i32) {
    %c0_i32 = arith.constant 0 : i32
    %c0_i32_0 = arith.constant 0 : i32
    %c0_i32_1 = arith.constant 0 : i32
    return %c0_i32, %c0_i32_0 : i32, i32
  }
  func.func @transform_5(%arg0: i32) -> (i32, i32) {
    %c0_i32 = arith.constant 0 : i32
    %c0_i32_0 = arith.constant 0 : i32
    %c0_i32_1 = arith.constant 0 : i32
    return %c0_i32, %c0_i32_0 : i32, i32
  }
  func.func @transform_6(%arg0: i32) -> (i32, i32) {
    %c0_i32 = arith.constant 0 : i32
    %c0_i32_0 = arith.constant 0 : i32
    %c0_i32_1 = arith.constant 0 : i32
    return %c0_i32, %c0_i32_0 : i32, i32
  }
  func.func @transform_7(%arg0: i32) -> (i32, i32) {
    %c0_i32 = arith.constant 0 : i32
    %c0_i32_0 = arith.constant 0 : i32
    %c0_i32_1 = arith.constant 0 : i32
    return %c0_i32, %c0_i32_0 : i32, i32
  }
  func.func @transform_8(%arg0: i32) -> (i32, i32) {
    %c0_i32 = arith.constant 0 : i32
    %c0_i32_0 = arith.constant 0 : i32
    %c0_i32_1 = arith.constant 0 : i32
    return %c0_i32, %c0_i32_0 : i32, i32
  }
  func.func @transform_9(%arg0: i32) -> (i32, i32) {
    %c0_i32 = arith.constant 0 : i32
    %c0_i32_0 = arith.constant 0 : i32
    %c0_i32_1 = arith.constant 0 : i32
    return %c0_i32, %c0_i32_0 : i32, i32
  }
  func.func @transform_10(%arg0: i32) -> (i32, i32) {
    %c0_i32 = arith.constant 0 : i32
    %c0_i32_0 = arith.constant 0 : i32
    %c0_i32_1 = arith.constant 0 : i32
    return %c0_i32, %c0_i32_0 : i32, i32
  }
  func.func @transform_11(%arg0: i32) -> (i32, i32) {
    %c0_i32 = arith.constant 0 : i32
    %c0_i32_0 = arith.constant 0 : i32
    return %arg0, %c0_i32 : i32, i32
  }
}

module attributes {stable_mosaic.version = 11 : i64} {
  func.func @_encoder_kernel(%arg0: i32, %arg1: memref<128x32xf32, #tpu.memory_space<vmem>>, %arg2: memref<32x64xf32, #tpu.memory_space<vmem>>, %arg3: memref<1x64xf32, #tpu.memory_space<vmem>>, %arg4: memref<64x64xf32, #tpu.memory_space<vmem>>, %arg5: memref<1x64xf32, #tpu.memory_space<vmem>>, %arg6: memref<64x64xf32, #tpu.memory_space<vmem>>, %arg7: memref<1x64xf32, #tpu.memory_space<vmem>>, %arg8: memref<64x64xf32, #tpu.memory_space<vmem>>, %arg9: memref<1x64xf32, #tpu.memory_space<vmem>>, %arg10: memref<64x128xf32, #tpu.memory_space<vmem>>, %arg11: memref<1x128xf32, #tpu.memory_space<vmem>>, %arg12: memref<128x128xf32, #tpu.memory_space<vmem>>) attributes {dimension_semantics = [#tpu.dimension_semantics<parallel>], iteration_bounds = array<i64: 4>, scalar_prefetch = 0 : i64, scratch_operands = 0 : i64, tpu.core_type = #tpu.core_type<tc>, window_params = [{transform_indices = @transform_0, window_bounds = array<i64: 128, 32>}, {pipeline_mode = #tpu.pipeline_mode<synchronous>, transform_indices = @transform_1, window_bounds = array<i64: 32, 64>}, {pipeline_mode = #tpu.pipeline_mode<synchronous>, transform_indices = @transform_2, window_bounds = array<i64: 1, 64>}, {pipeline_mode = #tpu.pipeline_mode<synchronous>, transform_indices = @transform_3, window_bounds = array<i64: 64, 64>}, {pipeline_mode = #tpu.pipeline_mode<synchronous>, transform_indices = @transform_4, window_bounds = array<i64: 1, 64>}, {pipeline_mode = #tpu.pipeline_mode<synchronous>, transform_indices = @transform_5, window_bounds = array<i64: 64, 64>}, {pipeline_mode = #tpu.pipeline_mode<synchronous>, transform_indices = @transform_6, window_bounds = array<i64: 1, 64>}, {pipeline_mode = #tpu.pipeline_mode<synchronous>, transform_indices = @transform_7, window_bounds = array<i64: 64, 64>}, {pipeline_mode = #tpu.pipeline_mode<synchronous>, transform_indices = @transform_8, window_bounds = array<i64: 1, 64>}, {pipeline_mode = #tpu.pipeline_mode<synchronous>, transform_indices = @transform_9, window_bounds = array<i64: 64, 128>}, {pipeline_mode = #tpu.pipeline_mode<synchronous>, transform_indices = @transform_10, window_bounds = array<i64: 1, 128>}, {transform_indices = @transform_11, window_bounds = array<i64: 128, 128>}]} {
    %c0 = arith.constant 0 : index
    %c0_0 = arith.constant 0 : index
    %0 = vector.load %arg1[%c0, %c0_0] : memref<128x32xf32, #tpu.memory_space<vmem>>, vector<128x32xf32>
    %c0_1 = arith.constant 0 : index
    %c0_2 = arith.constant 0 : index
    %1 = vector.load %arg2[%c0_1, %c0_2] : memref<32x64xf32, #tpu.memory_space<vmem>>, vector<32x64xf32>
    %cst = arith.constant dense<0.000000e+00> : vector<128x64xf32>
    %2 = tpu.matmul %0, %1, %cst {dimension_numbers = #tpu.dot_dimension_numbers<[1], [0], [0], [1], [0, 0, 1, 1], [], []>} : vector<128x32xf32>, vector<32x64xf32>, vector<128x64xf32> -> vector<128x64xf32>
    %c0_3 = arith.constant 0 : index
    %c0_4 = arith.constant 0 : index
    %3 = vector.load %arg3[%c0_3, %c0_4] : memref<1x64xf32, #tpu.memory_space<vmem>>, vector<1x64xf32>
    %4 = vector.broadcast %3 : vector<1x64xf32> to vector<128x64xf32>
    %5 = arith.addf %2, %4 : vector<128x64xf32>
    %cst_5 = arith.constant 0.000000e+00 : f32
    %6 = vector.broadcast %cst_5 : f32 to vector<128x64xf32>
    %7 = arith.maximumf %5, %6 : vector<128x64xf32>
    %c0_6 = arith.constant 0 : index
    %c0_7 = arith.constant 0 : index
    %8 = vector.load %arg4[%c0_6, %c0_7] : memref<64x64xf32, #tpu.memory_space<vmem>>, vector<64x64xf32>
    %cst_8 = arith.constant dense<0.000000e+00> : vector<128x64xf32>
    %9 = tpu.matmul %7, %8, %cst_8 {dimension_numbers = #tpu.dot_dimension_numbers<[1], [0], [0], [1], [0, 0, 1, 1], [], []>} : vector<128x64xf32>, vector<64x64xf32>, vector<128x64xf32> -> vector<128x64xf32>
    %c0_9 = arith.constant 0 : index
    %c0_10 = arith.constant 0 : index
    %10 = vector.load %arg5[%c0_9, %c0_10] : memref<1x64xf32, #tpu.memory_space<vmem>>, vector<1x64xf32>
    %11 = vector.broadcast %10 : vector<1x64xf32> to vector<128x64xf32>
    %12 = arith.addf %9, %11 : vector<128x64xf32>
    %cst_11 = arith.constant 0.000000e+00 : f32
    %13 = vector.broadcast %cst_11 : f32 to vector<128x64xf32>
    %14 = arith.maximumf %12, %13 : vector<128x64xf32>
    %c0_12 = arith.constant 0 : index
    %c0_13 = arith.constant 0 : index
    %15 = vector.load %arg6[%c0_12, %c0_13] : memref<64x64xf32, #tpu.memory_space<vmem>>, vector<64x64xf32>
    %cst_14 = arith.constant dense<0.000000e+00> : vector<128x64xf32>
    %16 = tpu.matmul %14, %15, %cst_14 {dimension_numbers = #tpu.dot_dimension_numbers<[1], [0], [0], [1], [0, 0, 1, 1], [], []>} : vector<128x64xf32>, vector<64x64xf32>, vector<128x64xf32> -> vector<128x64xf32>
    %c0_15 = arith.constant 0 : index
    %c0_16 = arith.constant 0 : index
    %17 = vector.load %arg7[%c0_15, %c0_16] : memref<1x64xf32, #tpu.memory_space<vmem>>, vector<1x64xf32>
    %18 = vector.broadcast %17 : vector<1x64xf32> to vector<128x64xf32>
    %19 = arith.addf %16, %18 : vector<128x64xf32>
    %cst_17 = arith.constant 0.000000e+00 : f32
    %20 = vector.broadcast %cst_17 : f32 to vector<128x64xf32>
    %21 = arith.maximumf %19, %20 : vector<128x64xf32>
    %c0_18 = arith.constant 0 : index
    %c0_19 = arith.constant 0 : index
    %22 = vector.load %arg8[%c0_18, %c0_19] : memref<64x64xf32, #tpu.memory_space<vmem>>, vector<64x64xf32>
    %cst_20 = arith.constant dense<0.000000e+00> : vector<128x64xf32>
    %23 = tpu.matmul %21, %22, %cst_20 {dimension_numbers = #tpu.dot_dimension_numbers<[1], [0], [0], [1], [0, 0, 1, 1], [], []>} : vector<128x64xf32>, vector<64x64xf32>, vector<128x64xf32> -> vector<128x64xf32>
    %c0_21 = arith.constant 0 : index
    %c0_22 = arith.constant 0 : index
    %24 = vector.load %arg9[%c0_21, %c0_22] : memref<1x64xf32, #tpu.memory_space<vmem>>, vector<1x64xf32>
    %25 = vector.broadcast %24 : vector<1x64xf32> to vector<128x64xf32>
    %26 = arith.addf %23, %25 : vector<128x64xf32>
    %cst_23 = arith.constant 0.000000e+00 : f32
    %27 = vector.broadcast %cst_23 : f32 to vector<128x64xf32>
    %28 = arith.maximumf %26, %27 : vector<128x64xf32>
    %c0_24 = arith.constant 0 : index
    %c0_25 = arith.constant 0 : index
    %29 = vector.load %arg10[%c0_24, %c0_25] : memref<64x128xf32, #tpu.memory_space<vmem>>, vector<64x128xf32>
    %cst_26 = arith.constant dense<0.000000e+00> : vector<128x128xf32>
    %30 = tpu.matmul %28, %29, %cst_26 {dimension_numbers = #tpu.dot_dimension_numbers<[1], [0], [0], [1], [0, 0, 1, 1], [], []>} : vector<128x64xf32>, vector<64x128xf32>, vector<128x128xf32> -> vector<128x128xf32>
    %c0_27 = arith.constant 0 : index
    %c0_28 = arith.constant 0 : index
    %31 = vector.load %arg11[%c0_27, %c0_28] : memref<1x128xf32, #tpu.memory_space<vmem>>, vector<1x128xf32>
    %32 = vector.broadcast %31 : vector<1x128xf32> to vector<128x128xf32>
    %33 = arith.addf %30, %32 : vector<128x128xf32>
    %c0_29 = arith.constant 0 : index
    %c0_30 = arith.constant 0 : index
    %34 = vector.load %arg12[%c0_29, %c0_30] : memref<128x128xf32, #tpu.memory_space<vmem>>, vector<128x128xf32>
    tpu.vector_store %arg12[%c0_29, %c0_30], %33 {strides = array<i32>} : memref<128x128xf32, #tpu.memory_space<vmem>>, vector<128x128xf32>,
    return
  }
  func.func @transform_0(%arg0: i32) -> (i32, i32) {
    %c0_i32 = arith.constant 0 : i32
    %c0_i32_0 = arith.constant 0 : i32
    return %arg0, %c0_i32 : i32, i32
  }
  func.func @transform_1(%arg0: i32) -> (i32, i32) {
    %c0_i32 = arith.constant 0 : i32
    %c0_i32_0 = arith.constant 0 : i32
    %c0_i32_1 = arith.constant 0 : i32
    return %c0_i32, %c0_i32_0 : i32, i32
  }
  func.func @transform_2(%arg0: i32) -> (i32, i32) {
    %c0_i32 = arith.constant 0 : i32
    %c0_i32_0 = arith.constant 0 : i32
    %c0_i32_1 = arith.constant 0 : i32
    return %c0_i32, %c0_i32_0 : i32, i32
  }
  func.func @transform_3(%arg0: i32) -> (i32, i32) {
    %c0_i32 = arith.constant 0 : i32
    %c0_i32_0 = arith.constant 0 : i32
    %c0_i32_1 = arith.constant 0 : i32
    return %c0_i32, %c0_i32_0 : i32, i32
  }
  func.func @transform_4(%arg0: i32) -> (i32, i32) {
    %c0_i32 = arith.constant 0 : i32
    %c0_i32_0 = arith.constant 0 : i32
    %c0_i32_1 = arith.constant 0 : i32
    return %c0_i32, %c0_i32_0 : i32, i32
  }
  func.func @transform_5(%arg0: i32) -> (i32, i32) {
    %c0_i32 = arith.constant 0 : i32
    %c0_i32_0 = arith.constant 0 : i32
    %c0_i32_1 = arith.constant 0 : i32
    return %c0_i32, %c0_i32_0 : i32, i32
  }
  func.func @transform_6(%arg0: i32) -> (i32, i32) {
    %c0_i32 = arith.constant 0 : i32
    %c0_i32_0 = arith.constant 0 : i32
    %c0_i32_1 = arith.constant 0 : i32
    return %c0_i32, %c0_i32_0 : i32, i32
  }
  func.func @transform_7(%arg0: i32) -> (i32, i32) {
    %c0_i32 = arith.constant 0 : i32
    %c0_i32_0 = arith.constant 0 : i32
    %c0_i32_1 = arith.constant 0 : i32
    return %c0_i32, %c0_i32_0 : i32, i32
  }
  func.func @transform_8(%arg0: i32) -> (i32, i32) {
    %c0_i32 = arith.constant 0 : i32
    %c0_i32_0 = arith.constant 0 : i32
    %c0_i32_1 = arith.constant 0 : i32
    return %c0_i32, %c0_i32_0 : i32, i32
  }
  func.func @transform_9(%arg0: i32) -> (i32, i32) {
    %c0_i32 = arith.constant 0 : i32
    %c0_i32_0 = arith.constant 0 : i32
    %c0_i32_1 = arith.constant 0 : i32
    return %c0_i32, %c0_i32_0 : i32, i32
  }
  func.func @transform_10(%arg0: i32) -> (i32, i32) {
    %c0_i32 = arith.constant 0 : i32
    %c0_i32_0 = arith.constant 0 : i32
    %c0_i32_1 = arith.constant 0 : i32
    return %c0_i32, %c0_i32_0 : i32, i32
  }
  func.func @transform_11(%arg0: i32) -> (i32, i32) {
    %c0_i32 = arith.constant 0 : i32
    %c0_i32_0 = arith.constant 0 : i32
    return %arg0, %c0_i32 : i32, i32
  }
}

</mosaic_0001>

<llo_original>
// kernel: vae_encoder_forward.1
$region0: #{vae_encoder_forward.1}
  #allocation0 [shape = 'u32[]', space=smem, size = 0x4, offset = 0x4, fixed_abs, tag = 'smem constant byte address 0x4 - core index']
  #allocation1 [shape = 'u32[144,128]{1,0:T(1,128)}', space=vmem, size = 0x12000, scoped, tag = 'internal scratch']
  %s0 = inlined_call_operand.hbm [shape: f32[8,32], index: 0, kind: input, shape index: {}]
  %s1 = inlined_call_operand.hbm [shape: f32[32,64], index: 1, kind: input, shape index: {}]
  %s2 = inlined_call_operand.vmem [shape: f32[1,64], index: 2, kind: input, shape index: {}]
  %s3 = inlined_call_operand.hbm [shape: f32[64,64], index: 3, kind: input, shape index: {}]
  %s4 = inlined_call_operand.vmem [shape: f32[1,64], index: 4, kind: input, shape index: {}]
  %s5 = inlined_call_operand.hbm [shape: f32[64,64], index: 5, kind: input, shape index: {}]
  %s6 = inlined_call_operand.vmem [shape: f32[1,64], index: 6, kind: input, shape index: {}]
  %s7 = inlined_call_operand.hbm [shape: f32[64,64], index: 7, kind: input, shape index: {}]
  %s8 = inlined_call_operand.vmem [shape: f32[1,64], index: 8, kind: input, shape index: {}]
  %s9 = inlined_call_operand.hbm [shape: f32[64,128], index: 9, kind: input, shape index: {}]
  %s10 = inlined_call_operand.vmem [shape: f32[1,128], index: 10, kind: input, shape index: {}]
  %s11 = inlined_call_operand.vmem [shape: f32[8,128], index: 11, kind: output, shape index: {}]
  %s12 = sld [smem:[#allocation0]]
  $region78: #{vae_encoder_forward.1} parent=0
    _
  %s14 = ssub.s32 1, %s12
  %s15 = scalar_select 0, %s14, %s12
  $region1: #{vae_encoder_forward.1} parent=0
    #allocation2 [shape = 'u8[4096]{0}', space=vmem, size = 0x1000, scoped, tag = 'input window, operand 0, single buffered']
    #allocation3 [shape = 's32[1]{0}', space=sflag, size = 0x4, scoped, tag = 'scoped memory for vae_encoder_forward.1']
    #allocation4 [shape = 'u8[16384]{0}', space=vmem, size = 0x4000, scoped, tag = 'input window, operand 1, single buffered']
    #allocation5 [shape = 's32[1]{0}', space=sflag, size = 0x4, scoped, tag = 'scoped memory for vae_encoder_forward.1']
    #allocation6 [shape = 'u8[32768]{0}', space=vmem, size = 0x8000, scoped, tag = 'input window, operand 3, single buffered']
    #allocation7 [shape = 'u8[32768]{0}', space=vmem, size = 0x8000, scoped, tag = 'input window, operand 5, single buffered']
    #allocation8 [shape = 's32[1]{0}', space=sflag, size = 0x4, scoped, tag = 'scoped memory for vae_encoder_forward.1']
    #allocation9 [shape = 'u8[32768]{0}', space=vmem, size = 0x8000, scoped, tag = 'input window, operand 7, single buffered']
    #allocation10 [shape = 'u8[32768]{0}', space=vmem, size = 0x8000, scoped, tag = 'input window, operand 9, single buffered']
    #allocation11 [shape = 's32[1]{0}', space=sflag, size = 0x4, scoped, tag = 'scoped memory for vae_encoder_forward.1']
    %16 = vsyncpa [#allocation3], 0
    %17 = vsyncpa [#allocation5], 0
    %18 = vsyncpa [#allocation8], 0
    %19 = vsyncpa [#allocation11], 0
    // Predicated region
    $region2: #{vae_encoder_forward.1} parent=1 // pred_check
      _
    $region3: #{vae_encoder_forward.1} parent=1 // pred_check_branch
      %21 = sbr.rel (0) target = $region5
    $region4: #{vae_encoder_forward.1} parent=1 // pred_region
      %s23 = ssub.s32 128, 128
      %24 = vsyncadd [#allocation3], %s23
      %s26 = sshll.u32 [#allocation2], 4
      %s27 = int_to_ptr.vmem [resolvable:$true] %s26
      %29 = dma.hbm_to_vmem [thread:$0]  %s0, 128, %s27, [#allocation3]
    $region5: #{vae_encoder_forward.1} parent=1 // pred_fallthru
      _
    // Predicated region
    $region6: #{vae_encoder_forward.1} parent=1 // pred_check
      _
    $region7: #{vae_encoder_forward.1} parent=1 // pred_check_branch
      %31 = sbr.rel (0) target = $region9
    $region8: #{vae_encoder_forward.1} parent=1 // pred_region
      %s33 = ssub.s32 512, 512
      %34 = vsyncadd [#allocation5], %s33
      %s35 = sshll.u32 [#allocation4], 4
      %s36 = int_to_ptr.vmem [resolvable:$true] %s35
      %41 = dma.hbm_to_vmem [thread:$0]  %s1, 512, %s36, [#allocation5], 128, 128, 8
    $region9: #{vae_encoder_forward.1} parent=1 // pred_fallthru
      _
    // Predicated region
    $region10: #{vae_encoder_forward.1} parent=1 // pred_check
      _
    $region11: #{vae_encoder_forward.1} parent=1 // pred_check_branch
      %43 = sbr.rel (0) target = $region13
    $region12: #{vae_encoder_forward.1} parent=1 // pred_region
      _
    $region13: #{vae_encoder_forward.1} parent=1 // pred_fallthru
      _
    // Predicated region
    $region14: #{vae_encoder_forward.1} parent=1 // pred_check
      _
    $region15: #{vae_encoder_forward.1} parent=1 // pred_check_branch
      %45 = sbr.rel (0) target = $region17
    $region16: #{vae_encoder_forward.1} parent=1 // pred_region
      %s47 = ssub.s32 1024, 1024
      %48 = vsyncadd [#allocation5], %s47
      %s49 = sshll.u32 [#allocation6], 4
      %s50 = int_to_ptr.vmem [resolvable:$true] %s49
      %55 = dma.hbm_to_vmem [thread:$0]  %s3, 1024, %s50, [#allocation5], 128, 128, 8
    $region17: #{vae_encoder_forward.1} parent=1 // pred_fallthru
      _
    // Predicated region
    $region18: #{vae_encoder_forward.1} parent=1 // pred_check
      _
    $region19: #{vae_encoder_forward.1} parent=1 // pred_check_branch
      %57 = sbr.rel (0) target = $region21
    $region20: #{vae_encoder_forward.1} parent=1 // pred_region
      _
    $region21: #{vae_encoder_forward.1} parent=1 // pred_fallthru
      _
    // Predicated region
    $region22: #{vae_encoder_forward.1} parent=1 // pred_check
      _
    $region23: #{vae_encoder_forward.1} parent=1 // pred_check_branch
      %59 = sbr.rel (0) target = $region25
    $region24: #{vae_encoder_forward.1} parent=1 // pred_region
      %s61 = ssub.s32 1024, 1024
      %62 = vsyncadd [#allocation8], %s61
      %s63 = sshll.u32 [#allocation7], 4
      %s64 = int_to_ptr.vmem [resolvable:$true] %s63
      %69 = dma.hbm_to_vmem [thread:$0]  %s5, 1024, %s64, [#allocation8], 128, 128, 8
    $region25: #{vae_encoder_forward.1} parent=1 // pred_fallthru
      _
    // Predicated region
    $region26: #{vae_encoder_forward.1} parent=1 // pred_check
      _
    $region27: #{vae_encoder_forward.1} parent=1 // pred_check_branch
      %71 = sbr.rel (0) target = $region29
    $region28: #{vae_encoder_forward.1} parent=1 // pred_region
      _
    $region29: #{vae_encoder_forward.1} parent=1 // pred_fallthru
      _
    // Predicated region
    $region30: #{vae_encoder_forward.1} parent=1 // pred_check
      _
    $region31: #{vae_encoder_forward.1} parent=1 // pred_check_branch
      %73 = sbr.rel (0) target = $region33
    $region32: #{vae_encoder_forward.1} parent=1 // pred_region
      %s75 = ssub.s32 1024, 1024
      %76 = vsyncadd [#allocation8], %s75
      %s77 = sshll.u32 [#allocation9], 4
      %s78 = int_to_ptr.vmem [resolvable:$true] %s77
      %83 = dma.hbm_to_vmem [thread:$0]  %s7, 1024, %s78, [#allocation8], 128, 128, 8
    $region33: #{vae_encoder_forward.1} parent=1 // pred_fallthru
      _
    // Predicated region
    $region34: #{vae_encoder_forward.1} parent=1 // pred_check
      _
    $region35: #{vae_encoder_forward.1} parent=1 // pred_check_branch
      %85 = sbr.rel (0) target = $region37
    $region36: #{vae_encoder_forward.1} parent=1 // pred_region
      _
    $region37: #{vae_encoder_forward.1} parent=1 // pred_fallthru
      _
    // Predicated region
    $region38: #{vae_encoder_forward.1} parent=1 // pred_check
      _
    $region39: #{vae_encoder_forward.1} parent=1 // pred_check_branch
      %87 = sbr.rel (0) target = $region41
    $region40: #{vae_encoder_forward.1} parent=1 // pred_region
      %s89 = ssub.s32 1024, 1024
      %90 = vsyncadd [#allocation11], %s89
      %s91 = sshll.u32 [#allocation10], 4
      %s92 = int_to_ptr.vmem [resolvable:$true] %s91
      %97 = dma.hbm_to_vmem [thread:$0]  %s9, 1024, %s92, [#allocation11], 128, 128, 8
    $region41: #{vae_encoder_forward.1} parent=1 // pred_fallthru
      _
    // Predicated region
    $region42: #{vae_encoder_forward.1} parent=1 // pred_check
      _
    $region43: #{vae_encoder_forward.1} parent=1 // pred_check_branch
      %99 = sbr.rel (0) target = $region45
    $region44: #{vae_encoder_forward.1} parent=1 // pred_region
      _
    $region45: #{vae_encoder_forward.1} parent=1 // pred_fallthru
      _
    // Predicated region
    $region46: #{vae_encoder_forward.1} parent=1 // pred_check
      _
    $region47: #{vae_encoder_forward.1} parent=1 // pred_check_branch
      %101 = sbr.rel (0) target = $region49
    $region48: #{vae_encoder_forward.1} parent=1 // pred_region
      %102 = dma.done [#allocation3], 128
    $region49: #{vae_encoder_forward.1} parent=1 // pred_fallthru
      _
    // Predicated region
    $region50: #{vae_encoder_forward.1} parent=1 // pred_check
      _
    $region51: #{vae_encoder_forward.1} parent=1 // pred_check_branch
      %104 = sbr.rel (0) target = $region53
    $region52: #{vae_encoder_forward.1} parent=1 // pred_region
      %105 = dma.done [#allocation5], 512
    $region53: #{vae_encoder_forward.1} parent=1 // pred_fallthru
      _
    // Predicated region
    $region54: #{vae_encoder_forward.1} parent=1 // pred_check
      _
    $region55: #{vae_encoder_forward.1} parent=1 // pred_check_branch
      %107 = sbr.rel (0) target = $region57
    $region56: #{vae_encoder_forward.1} parent=1 // pred_region
      %108 = dma.done [#allocation5], 1024
    $region57: #{vae_encoder_forward.1} parent=1 // pred_fallthru
      _
    // Predicated region
    $region58: #{vae_encoder_forward.1} parent=1 // pred_check
      _
    $region59: #{vae_encoder_forward.1} parent=1 // pred_check_branch
      %110 = sbr.rel (0) target = $region61
    $region60: #{vae_encoder_forward.1} parent=1 // pred_region
      %111 = dma.done [#allocation8], 1024
    $region61: #{vae_encoder_forward.1} parent=1 // pred_fallthru
      _
    // Predicated region
    $region62: #{vae_encoder_forward.1} parent=1 // pred_check
      _
    $region63: #{vae_encoder_forward.1} parent=1 // pred_check_branch
      %113 = sbr.rel (0) target = $region65
    $region64: #{vae_encoder_forward.1} parent=1 // pred_region
      %114 = dma.done [#allocation8], 1024
    $region65: #{vae_encoder_forward.1} parent=1 // pred_fallthru
      _
    // Predicated region
    $region66: #{vae_encoder_forward.1} parent=1 // pred_check
      _
    $region67: #{vae_encoder_forward.1} parent=1 // pred_check_branch
      %116 = sbr.rel (0) target = $region69
    $region68: #{vae_encoder_forward.1} parent=1 // pred_region
      %117 = dma.done [#allocation11], 1024
    $region69: #{vae_encoder_forward.1} parent=1 // pred_fallthru
      _
    %v118 = vld [vmem:[#allocation2] sm:$0xff]
    %v119 = vld [vmem:[#allocation4] sm:$0xff]
    %v120 = vld [vmem:[#allocation4 + $0x8] sm:$0xff]
    %v121 = vld [vmem:[#allocation4 + $0x10] sm:$0xff]
    %v122 = vld [vmem:[#allocation4 + $0x18] sm:$0xff]
    %v123 = vld [vmem:[%s2] sm:$0x1]
    %v125 = vlaneseq
    %v126 = vshrl.u32 %v125, 7
    %v127 = vsub.s32 0, %v126
    %v128 = vrot.slane %v123, %v127
    %vm130 = vcmask 261120
    %v132 = vsel %vm130, %v118, 0
    %134 = vmatprep.subr.mxu0 0.0
    %135 = vmatpush1.msra.mxu0 0.0
    %136 = vmatprep.subr.mxu0 0.0
    %137 = vmatpush1.msra.mxu0 0.0
    %138 = vmatprep.subr.mxu0 0.0
    %139 = vmatpush1.msra.mxu0 0.0
    %140 = vmatprep.subr.mxu0 0.0
    %141 = vmatpush1.msra.mxu0 0.0
    %142 = vmatprep.subr.mxu0 0.0
    %143 = vmatpush1.msra.mxu0 0.0
    %144 = vmatprep.subr.mxu0 0.0
    %145 = vmatpush1.msra.mxu0 0.0
    %146 = vmatprep.subr.mxu0 0.0
    %147 = vmatpush1.msra.mxu0 0.0
    %148 = vmatprep.subr.mxu0 0.0
    %149 = vmatpush1.msra.mxu0 0.0
    %150 = vmatprep.subr.mxu0 0.0
    %151 = vmatpush1.msra.mxu0 0.0
    %152 = vmatprep.subr.mxu0 0.0
    %153 = vmatpush1.msra.mxu0 0.0
    %154 = vmatprep.subr.mxu0 0.0
    %155 = vmatpush1.msra.mxu0 0.0
    %156 = vmatprep.subr.mxu0 0.0
    %157 = vmatpush1.msra.mxu0 0.0
    %158 = vmatprep.subr.mxu0 0.0
    %159 = vmatpush1.msra.mxu0 %v122
    %160 = vmatprep.subr.mxu0 0.0
    %161 = vmatpush1.msra.mxu0 %v121
    %162 = vmatprep.subr.mxu0 0.0
    %163 = vmatpush1.msra.mxu0 %v120
    %164 = vmatprep.subr.mxu0 0.0
    %165 = vmatpush1.msra.mxu0 %v119
    %166 = vmatprep.subr.mxu0 0.0
    %167 = vmatpush2.msra.mxu0 0.0
    %168 = vmatprep.subr.mxu0 0.0
    %169 = vmatpush2.msra.mxu0 0.0
    %170 = vmatprep.subr.mxu0 0.0
    %171 = vmatpush2.msra.mxu0 0.0
    %172 = vmatprep.subr.mxu0 0.0
    %173 = vmatpush2.msra.mxu0 0.0
    %174 = vmatprep.subr.mxu0 0.0
    %175 = vmatpush2.msra.mxu0 0.0
    %176 = vmatprep.subr.mxu0 0.0
    %177 = vmatpush2.msra.mxu0 0.0
    %178 = vmatprep.subr.mxu0 0.0
    %179 = vmatpush2.msra.mxu0 0.0
    %180 = vmatprep.subr.mxu0 0.0
    %181 = vmatpush2.msra.mxu0 0.0
    %182 = vmatprep.subr.mxu0 0.0
    %183 = vmatpush2.msra.mxu0 0.0
    %184 = vmatprep.subr.mxu0 0.0
    %185 = vmatpush2.msra.mxu0 0.0
    %186 = vmatprep.subr.mxu0 0.0
    %187 = vmatpush2.msra.mxu0 0.0
    %188 = vmatprep.subr.mxu0 0.0
    %189 = vmatpush2.msra.mxu0 0.0
    %190 = vmatprep.subr.mxu0 0.0
    %191 = vmatpush2.msra.mxu0 0.0
    %192 = vmatprep.subr.mxu0 0.0
    %193 = vmatpush2.msra.mxu0 0.0
    %194 = vmatprep.subr.mxu0 0.0
    %195 = vmatpush2.msra.mxu0 0.0
    %196 = vmatprep.subr.mxu0 0.0
    %197 = vmatpush2.msra.mxu0 0.0
    %198 = vmatprep.mubr.f32.mxu0 0.0
    %199 = vmatmul.mubr.f32.gmra.mxu0 %v132
    %v200 = vpop.f32.mrf.mxu0
    %v201 = vadd.f32 %v128, %v200
    %v202 = vpop.f32.mrf.mxu0
    %203 = vdwg.mxu0
    %v204 = vmax.f32 %v201, 0.0
    %v205 = vld [vmem:[#allocation6] sm:$0xff]
    %v206 = vld [vmem:[#allocation6 + $0x8] sm:$0xff]
    %v207 = vld [vmem:[#allocation6 + $0x10] sm:$0xff]
    %v208 = vld [vmem:[#allocation6 + $0x18] sm:$0xff]
    %v209 = vld [vmem:[#allocation6 + $0x20] sm:$0xff]
    %v210 = vld [vmem:[#allocation6 + $0x28] sm:$0xff]
    %v211 = vld [vmem:[#allocation6 + $0x30] sm:$0xff]
    %v212 = vld [vmem:[#allocation6 + $0x38] sm:$0xff]
    %v213 = vld [vmem:[%s4] sm:$0x1]
    %v215 = vlaneseq
    %v216 = vshrl.u32 %v215, 7
    %v217 = vsub.s32 0, %v216
    %v218 = vrot.slane %v213, %v217
    %vm220 = vcmask 523264
    %v222 = vsel %vm220, %v204, 0
    %224 = vmatprep.subr.mxu0 0.0
    %225 = vmatpush1.msra.mxu0 0.0
    %226 = vmatprep.subr.mxu0 0.0
    %227 = vmatpush1.msra.mxu0 0.0
    %228 = vmatprep.subr.mxu0 0.0
    %229 = vmatpush1.msra.mxu0 0.0
    %230 = vmatprep.subr.mxu0 0.0
    %231 = vmatpush1.msra.mxu0 0.0
    %232 = vmatprep.subr.mxu0 0.0
    %233 = vmatpush1.msra.mxu0 0.0
    %234 = vmatprep.subr.mxu0 0.0
    %235 = vmatpush1.msra.mxu0 0.0
    %236 = vmatprep.subr.mxu0 0.0
    %237 = vmatpush1.msra.mxu0 0.0
    %238 = vmatprep.subr.mxu0 0.0
    %239 = vmatpush1.msra.mxu0 0.0
    %240 = vmatprep.subr.mxu0 0.0
    %241 = vmatpush1.msra.mxu0 %v212
    %242 = vmatprep.subr.mxu0 0.0
    %243 = vmatpush1.msra.mxu0 %v211
    %244 = vmatprep.subr.mxu0 0.0
    %245 = vmatpush1.msra.mxu0 %v210
    %246 = vmatprep.subr.mxu0 0.0
    %247 = vmatpush1.msra.mxu0 %v209
    %248 = vmatprep.subr.mxu0 0.0
    %249 = vmatpush1.msra.mxu0 %v208
    %250 = vmatprep.subr.mxu0 0.0
    %251 = vmatpush1.msra.mxu0 %v207
    %252 = vmatprep.subr.mxu0 0.0
    %253 = vmatpush1.msra.mxu0 %v206
    %254 = vmatprep.subr.mxu0 0.0
    %255 = vmatpush1.msra.mxu0 %v205
    %256 = vmatprep.subr.mxu0 0.0
    %257 = vmatpush2.msra.mxu0 0.0
    %258 = vmatprep.subr.mxu0 0.0
    %259 = vmatpush2.msra.mxu0 0.0
    %260 = vmatprep.subr.mxu0 0.0
    %261 = vmatpush2.msra.mxu0 0.0
    %262 = vmatprep.subr.mxu0 0.0
    %263 = vmatpush2.msra.mxu0 0.0
    %264 = vmatprep.subr.mxu0 0.0
    %265 = vmatpush2.msra.mxu0 0.0
    %266 = vmatprep.subr.mxu0 0.0
    %267 = vmatpush2.msra.mxu0 0.0
    %268 = vmatprep.subr.mxu0 0.0
    %269 = vmatpush2.msra.mxu0 0.0
    %270 = vmatprep.subr.mxu0 0.0
    %271 = vmatpush2.msra.mxu0 0.0
    %272 = vmatprep.subr.mxu0 0.0
    %273 = vmatpush2.msra.mxu0 0.0
    %274 = vmatprep.subr.mxu0 0.0
    %275 = vmatpush2.msra.mxu0 0.0
    %276 = vmatprep.subr.mxu0 0.0
    %277 = vmatpush2.msra.mxu0 0.0
    %278 = vmatprep.subr.mxu0 0.0
    %279 = vmatpush2.msra.mxu0 0.0
    %280 = vmatprep.subr.mxu0 0.0
    %281 = vmatpush2.msra.mxu0 0.0
    %282 = vmatprep.subr.mxu0 0.0
    %283 = vmatpush2.msra.mxu0 0.0
    %284 = vmatprep.subr.mxu0 0.0
    %285 = vmatpush2.msra.mxu0 0.0
    %286 = vmatprep.subr.mxu0 0.0
    %287 = vmatpush2.msra.mxu0 0.0
    %288 = vmatprep.mubr.f32.mxu0 0.0
    %289 = vmatmul.mubr.f32.gmra.mxu0 %v222
    %v290 = vpop.f32.mrf.mxu0
    %v291 = vadd.f32 %v218, %v290
    %v292 = vpop.f32.mrf.mxu0
    %293 = vdwg.mxu0
    %v294 = vmax.f32 %v291, 0.0
    %v295 = vld [vmem:[#allocation7] sm:$0xff]
    %v296 = vld [vmem:[#allocation7 + $0x8] sm:$0xff]
    %v297 = vld [vmem:[#allocation7 + $0x10] sm:$0xff]
    %v298 = vld [vmem:[#allocation7 + $0x18] sm:$0xff]
    %v299 = vld [vmem:[#allocation7 + $0x20] sm:$0xff]
    %v300 = vld [vmem:[#allocation7 + $0x28] sm:$0xff]
    %v301 = vld [vmem:[#allocation7 + $0x30] sm:$0xff]
    %v302 = vld [vmem:[#allocation7 + $0x38] sm:$0xff]
    %v303 = vld [vmem:[%s6] sm:$0x1]
    %v305 = vlaneseq
    %v306 = vshrl.u32 %v305, 7
    %v307 = vsub.s32 0, %v306
    %v308 = vrot.slane %v303, %v307
    %v311 = vsel %vm220, %v294, 0
    %313 = vmatprep.subr.mxu0 0.0
    %314 = vmatpush1.msra.mxu0 0.0
    %315 = vmatprep.subr.mxu0 0.0
    %316 = vmatpush1.msra.mxu0 0.0
    %317 = vmatprep.subr.mxu0 0.0
    %318 = vmatpush1.msra.mxu0 0.0
    %319 = vmatprep.subr.mxu0 0.0
    %320 = vmatpush1.msra.mxu0 0.0
    %321 = vmatprep.subr.mxu0 0.0
    %322 = vmatpush1.msra.mxu0 0.0
    %323 = vmatprep.subr.mxu0 0.0
    %324 = vmatpush1.msra.mxu0 0.0
    %325 = vmatprep.subr.mxu0 0.0
    %326 = vmatpush1.msra.mxu0 0.0
    %327 = vmatprep.subr.mxu0 0.0
    %328 = vmatpush1.msra.mxu0 0.0
    %329 = vmatprep.subr.mxu0 0.0
    %330 = vmatpush1.msra.mxu0 %v302
    %331 = vmatprep.subr.mxu0 0.0
    %332 = vmatpush1.msra.mxu0 %v301
    %333 = vmatprep.subr.mxu0 0.0
    %334 = vmatpush1.msra.mxu0 %v300
    %335 = vmatprep.subr.mxu0 0.0
    %336 = vmatpush1.msra.mxu0 %v299
    %337 = vmatprep.subr.mxu0 0.0
    %338 = vmatpush1.msra.mxu0 %v298
    %339 = vmatprep.subr.mxu0 0.0
    %340 = vmatpush1.msra.mxu0 %v297
    %341 = vmatprep.subr.mxu0 0.0
    %342 = vmatpush1.msra.mxu0 %v296
    %343 = vmatprep.subr.mxu0 0.0
    %344 = vmatpush1.msra.mxu0 %v295
    %345 = vmatprep.subr.mxu0 0.0
    %346 = vmatpush2.msra.mxu0 0.0
    %347 = vmatprep.subr.mxu0 0.0
    %348 = vmatpush2.msra.mxu0 0.0
    %349 = vmatprep.subr.mxu0 0.0
    %350 = vmatpush2.msra.mxu0 0.0
    %351 = vmatprep.subr.mxu0 0.0
    %352 = vmatpush2.msra.mxu0 0.0
    %353 = vmatprep.subr.mxu0 0.0
    %354 = vmatpush2.msra.mxu0 0.0
    %355 = vmatprep.subr.mxu0 0.0
    %356 = vmatpush2.msra.mxu0 0.0
    %357 = vmatprep.subr.mxu0 0.0
    %358 = vmatpush2.msra.mxu0 0.0
    %359 = vmatprep.subr.mxu0 0.0
    %360 = vmatpush2.msra.mxu0 0.0
    %361 = vmatprep.subr.mxu0 0.0
    %362 = vmatpush2.msra.mxu0 0.0
    %363 = vmatprep.subr.mxu0 0.0
    %364 = vmatpush2.msra.mxu0 0.0
    %365 = vmatprep.subr.mxu0 0.0
    %366 = vmatpush2.msra.mxu0 0.0
    %367 = vmatprep.subr.mxu0 0.0
    %368 = vmatpush2.msra.mxu0 0.0
    %369 = vmatprep.subr.mxu0 0.0
    %370 = vmatpush2.msra.mxu0 0.0
    %371 = vmatprep.subr.mxu0 0.0
    %372 = vmatpush2.msra.mxu0 0.0
    %373 = vmatprep.subr.mxu0 0.0
    %374 = vmatpush2.msra.mxu0 0.0
    %375 = vmatprep.subr.mxu0 0.0
    %376 = vmatpush2.msra.mxu0 0.0
    %377 = vmatprep.mubr.f32.mxu0 0.0
    %378 = vmatmul.mubr.f32.gmra.mxu0 %v311
    %v379 = vpop.f32.mrf.mxu0
    %v380 = vadd.f32 %v308, %v379
    %v381 = vpop.f32.mrf.mxu0
    %382 = vdwg.mxu0
    %v383 = vmax.f32 %v380, 0.0
    %v384 = vld [vmem:[#allocation9] sm:$0xff]
    %v385 = vld [vmem:[#allocation9 + $0x8] sm:$0xff]
    %v386 = vld [vmem:[#allocation9 + $0x10] sm:$0xff]
    %v387 = vld [vmem:[#allocation9 + $0x18] sm:$0xff]
    %v388 = vld [vmem:[#allocation9 + $0x20] sm:$0xff]
    %v389 = vld [vmem:[#allocation9 + $0x28] sm:$0xff]
    %v390 = vld [vmem:[#allocation9 + $0x30] sm:$0xff]
    %v391 = vld [vmem:[#allocation9 + $0x38] sm:$0xff]
    %v392 = vld [vmem:[%s8] sm:$0x1]
    %v394 = vlaneseq
    %v395 = vshrl.u32 %v394, 7
    %v396 = vsub.s32 0, %v395
    %v397 = vrot.slane %v392, %v396
    %v400 = vsel %vm220, %v383, 0
    %402 = vmatprep.subr.mxu0 0.0
    %403 = vmatpush1.msra.mxu0 0.0
    %404 = vmatprep.subr.mxu0 0.0
    %405 = vmatpush1.msra.mxu0 0.0
    %406 = vmatprep.subr.mxu0 0.0
    %407 = vmatpush1.msra.mxu0 0.0
    %408 = vmatprep.subr.mxu0 0.0
    %409 = vmatpush1.msra.mxu0 0.0
    %410 = vmatprep.subr.mxu0 0.0
    %411 = vmatpush1.msra.mxu0 0.0
    %412 = vmatprep.subr.mxu0 0.0
    %413 = vmatpush1.msra.mxu0 0.0
    %414 = vmatprep.subr.mxu0 0.0
    %415 = vmatpush1.msra.mxu0 0.0
    %416 = vmatprep.subr.mxu0 0.0
    %417 = vmatpush1.msra.mxu0 0.0
    %418 = vmatprep.subr.mxu0 0.0
    %419 = vmatpush1.msra.mxu0 %v391
    %420 = vmatprep.subr.mxu0 0.0
    %421 = vmatpush1.msra.mxu0 %v390
    %422 = vmatprep.subr.mxu0 0.0
    %423 = vmatpush1.msra.mxu0 %v389
    %424 = vmatprep.subr.mxu0 0.0
    %425 = vmatpush1.msra.mxu0 %v388
    %426 = vmatprep.subr.mxu0 0.0
    %427 = vmatpush1.msra.mxu0 %v387
    %428 = vmatprep.subr.mxu0 0.0
    %429 = vmatpush1.msra.mxu0 %v386
    %430 = vmatprep.subr.mxu0 0.0
    %431 = vmatpush1.msra.mxu0 %v385
    %432 = vmatprep.subr.mxu0 0.0
    %433 = vmatpush1.msra.mxu0 %v384
    %434 = vmatprep.subr.mxu0 0.0
    %435 = vmatpush2.msra.mxu0 0.0
    %436 = vmatprep.subr.mxu0 0.0
    %437 = vmatpush2.msra.mxu0 0.0
    %438 = vmatprep.subr.mxu0 0.0
    %439 = vmatpush2.msra.mxu0 0.0
    %440 = vmatprep.subr.mxu0 0.0
    %441 = vmatpush2.msra.mxu0 0.0
    %442 = vmatprep.subr.mxu0 0.0
    %443 = vmatpush2.msra.mxu0 0.0
    %444 = vmatprep.subr.mxu0 0.0
    %445 = vmatpush2.msra.mxu0 0.0
    %446 = vmatprep.subr.mxu0 0.0
    %447 = vmatpush2.msra.mxu0 0.0
    %448 = vmatprep.subr.mxu0 0.0
    %449 = vmatpush2.msra.mxu0 0.0
    %450 = vmatprep.subr.mxu0 0.0
    %451 = vmatpush2.msra.mxu0 0.0
    %452 = vmatprep.subr.mxu0 0.0
    %453 = vmatpush2.msra.mxu0 0.0
    %454 = vmatprep.subr.mxu0 0.0
    %455 = vmatpush2.msra.mxu0 0.0
    %456 = vmatprep.subr.mxu0 0.0
    %457 = vmatpush2.msra.mxu0 0.0
    %458 = vmatprep.subr.mxu0 0.0
    %459 = vmatpush2.msra.mxu0 0.0
    %460 = vmatprep.subr.mxu0 0.0
    %461 = vmatpush2.msra.mxu0 0.0
    %462 = vmatprep.subr.mxu0 0.0
    %463 = vmatpush2.msra.mxu0 0.0
    %464 = vmatprep.subr.mxu0 0.0
    %465 = vmatpush2.msra.mxu0 0.0
    %466 = vmatprep.mubr.f32.mxu0 0.0
    %467 = vmatmul.mubr.f32.gmra.mxu0 %v400
    %v468 = vpop.f32.mrf.mxu0
    %v469 = vadd.f32 %v397, %v468
    %v470 = vpop.f32.mrf.mxu0
    %471 = vdwg.mxu0
    %v472 = vmax.f32 %v469, 0.0
    %v473 = vld [vmem:[#allocation10] sm:$0xff]
    %v474 = vld [vmem:[#allocation10 + $0x8] sm:$0xff]
    %v475 = vld [vmem:[#allocation10 + $0x10] sm:$0xff]
    %v476 = vld [vmem:[#allocation10 + $0x18] sm:$0xff]
    %v477 = vld [vmem:[#allocation10 + $0x20] sm:$0xff]
    %v478 = vld [vmem:[#allocation10 + $0x28] sm:$0xff]
    %v479 = vld [vmem:[#allocation10 + $0x30] sm:$0xff]
    %v480 = vld [vmem:[#allocation10 + $0x38] sm:$0xff]
    %v481 = vld [vmem:[%s10] sm:$0x1]
    %v483 = vlaneseq
    %v484 = vshrl.u32 %v483, 7
    %v485 = vsub.s32 0, %v484
    %v486 = vrot.slane %v481, %v485
    %v489 = vsel %vm220, %v472, 0
    %491 = vmatprep.subr.mxu0 0.0
    %492 = vmatpush1.msra.mxu0 0.0
    %493 = vmatprep.subr.mxu0 0.0
    %494 = vmatpush1.msra.mxu0 0.0
    %495 = vmatprep.subr.mxu0 0.0
    %496 = vmatpush1.msra.mxu0 0.0
    %497 = vmatprep.subr.mxu0 0.0
    %498 = vmatpush1.msra.mxu0 0.0
    %499 = vmatprep.subr.mxu0 0.0
    %500 = vmatpush1.msra.mxu0 0.0
    %501 = vmatprep.subr.mxu0 0.0
    %502 = vmatpush1.msra.mxu0 0.0
    %503 = vmatprep.subr.mxu0 0.0
    %504 = vmatpush1.msra.mxu0 0.0
    %505 = vmatprep.subr.mxu0 0.0
    %506 = vmatpush1.msra.mxu0 0.0
    %507 = vmatprep.subr.mxu0 0.0
    %508 = vmatpush1.msra.mxu0 %v480
    %509 = vmatprep.subr.mxu0 0.0
    %510 = vmatpush1.msra.mxu0 %v479
    %511 = vmatprep.subr.mxu0 0.0
    %512 = vmatpush1.msra.mxu0 %v478
    %513 = vmatprep.subr.mxu0 0.0
    %514 = vmatpush1.msra.mxu0 %v477
    %515 = vmatprep.subr.mxu0 0.0
    %516 = vmatpush1.msra.mxu0 %v476
    %517 = vmatprep.subr.mxu0 0.0
    %518 = vmatpush1.msra.mxu0 %v475
    %519 = vmatprep.subr.mxu0 0.0
    %520 = vmatpush1.msra.mxu0 %v474
    %521 = vmatprep.subr.mxu0 0.0
    %522 = vmatpush1.msra.mxu0 %v473
    %523 = vmatprep.subr.mxu0 0.0
    %524 = vmatpush2.msra.mxu0 0.0
    %525 = vmatprep.subr.mxu0 0.0
    %526 = vmatpush2.msra.mxu0 0.0
    %527 = vmatprep.subr.mxu0 0.0
    %528 = vmatpush2.msra.mxu0 0.0
    %529 = vmatprep.subr.mxu0 0.0
    %530 = vmatpush2.msra.mxu0 0.0
    %531 = vmatprep.subr.mxu0 0.0
    %532 = vmatpush2.msra.mxu0 0.0
    %533 = vmatprep.subr.mxu0 0.0
    %534 = vmatpush2.msra.mxu0 0.0
    %535 = vmatprep.subr.mxu0 0.0
    %536 = vmatpush2.msra.mxu0 0.0
    %537 = vmatprep.subr.mxu0 0.0
    %538 = vmatpush2.msra.mxu0 0.0
    %539 = vmatprep.subr.mxu0 0.0
    %540 = vmatpush2.msra.mxu0 0.0
    %541 = vmatprep.subr.mxu0 0.0
    %542 = vmatpush2.msra.mxu0 0.0
    %543 = vmatprep.subr.mxu0 0.0
    %544 = vmatpush2.msra.mxu0 0.0
    %545 = vmatprep.subr.mxu0 0.0
    %546 = vmatpush2.msra.mxu0 0.0
    %547 = vmatprep.subr.mxu0 0.0
    %548 = vmatpush2.msra.mxu0 0.0
    %549 = vmatprep.subr.mxu0 0.0
    %550 = vmatpush2.msra.mxu0 0.0
    %551 = vmatprep.subr.mxu0 0.0
    %552 = vmatpush2.msra.mxu0 0.0
    %553 = vmatprep.subr.mxu0 0.0
    %554 = vmatpush2.msra.mxu0 0.0
    %555 = vmatprep.mubr.f32.mxu0 0.0
    %556 = vmatmul.mubr.f32.gmra.mxu0 %v489
    %v557 = vpop.f32.mrf.mxu0
    %v558 = vadd.f32 %v486, %v557
    %v559 = vpop.f32.mrf.mxu0
    %560 = vdwg.mxu0
    %561 = vst [vmem:[%s11] sm:$0xff] %v558
    // Predicated region
    $region70: #{vae_encoder_forward.1} parent=1 // pred_check
      _
    $region71: #{vae_encoder_forward.1} parent=1 // pred_check_branch
      %563 = sbr.rel (0) target = $region73
    $region72: #{vae_encoder_forward.1} parent=1 // pred_region
      _
    $region73: #{vae_encoder_forward.1} parent=1 // pred_fallthru
      _
    // Predicated region
    $region74: #{vae_encoder_forward.1} parent=1 // pred_check
      _
    $region75: #{vae_encoder_forward.1} parent=1 // pred_check_branch
      %565 = sbr.rel (0) target = $region77
    $region76: #{vae_encoder_forward.1} parent=1 // pred_region
      _
    $region77: #{vae_encoder_forward.1} parent=1 // pred_fallthru
      _
    %566 = vsyncpa [#allocation3], 1
    %567 = vsyncpa [#allocation5], 1
    %568 = vsyncpa [#allocation8], 1
    %569 = vsyncpa [#allocation11], 1

// kernel: vae_encoder_forward.1
$region0: #{vae_encoder_forward.1}
  #allocation0 [shape = 'u32[]', space=smem, size = 0x4, offset = 0x4, fixed_abs, tag = 'smem constant byte address 0x4 - core index']
  #allocation1 [shape = 'u32[144,128]{1,0:T(1,128)}', space=vmem, size = 0x12000, scoped, tag = 'internal scratch']
  %s0 = inlined_call_operand.vmem [shape: f32[512,32], index: 0, kind: input, shape index: {}]
  %s1 = inlined_call_operand.vmem [shape: f32[32,64], index: 1, kind: input, shape index: {}]
  %s2 = inlined_call_operand.vmem [shape: f32[1,64], index: 2, kind: input, shape index: {}]
  %s3 = inlined_call_operand.vmem [shape: f32[64,64], index: 3, kind: input, shape index: {}]
  %s4 = inlined_call_operand.vmem [shape: f32[1,64], index: 4, kind: input, shape index: {}]
  %s5 = inlined_call_operand.vmem [shape: f32[64,64], index: 5, kind: input, shape index: {}]
  %s6 = inlined_call_operand.vmem [shape: f32[1,64], index: 6, kind: input, shape index: {}]
  %s7 = inlined_call_operand.vmem [shape: f32[64,64], index: 7, kind: input, shape index: {}]
  %s8 = inlined_call_operand.vmem [shape: f32[1,64], index: 8, kind: input, shape index: {}]
  %s9 = inlined_call_operand.vmem [shape: f32[64,128], index: 9, kind: input, shape index: {}]
  %s10 = inlined_call_operand.vmem [shape: f32[1,128], index: 10, kind: input, shape index: {}]
  %s11 = inlined_call_operand.vmem [shape: f32[512,128], index: 11, kind: output, shape index: {}]
  %s12 = sld [smem:[#allocation0]]
  $region77: #{vae_encoder_forward.1} parent=0
    _
  %s14 = ssub.s32 1, %s12
  %s15 = scalar_select 0, %s14, %s12
  loop: start=0, step=1, limit=6
  $region2: #{vae_encoder_forward.1} parent=0 // loop_pre_header
    _
  $region3: #{vae_encoder_forward.1} parent=0 // loop_header
    %s17 = sphi 0, %s21
    %p18 = scmp.ge.s32.totalorder %s17, 6
    %s27 = sphi 0, %s29
    %s30 = sphi 0, %s27
    %s31 = sphi 0, %s30
    %s47 = sphi 0, %s31
    %s51 = sphi 0, %s51
    %s53 = sphi 0, %s51
    %s54 = sphi 0, %s53
    %s68 = sphi 0, %s54
    %s72 = sphi 0, %s72
    %s74 = sphi 0, %s72
    %s75 = sphi 0, %s74
    %s89 = sphi 0, %s75
    %s93 = sphi 0, %s93
    %s95 = sphi 0, %s93
    %s96 = sphi 0, %s95
    %s110 = sphi 0, %s96
    %s114 = sphi 0, %s114
    %s116 = sphi 0, %s114
    %s117 = sphi 0, %s116
    %s131 = sphi 0, %s117
    %s135 = sphi 0, %s135
    %s137 = sphi 0, %s135
    %s138 = sphi 0, %s137
    %s152 = sphi 0, %s138
    %s156 = sphi 0, %s156
    %s158 = sphi 0, %s156
    %s159 = sphi 0, %s158
    %s173 = sphi 0, %s159
    %s177 = sphi 0, %s177
    %s179 = sphi 0, %s177
    %s180 = sphi 0, %s179
    %s194 = sphi 0, %s180
    %s198 = sphi 0, %s198
    %s200 = sphi 0, %s198
    %s201 = sphi 0, %s200
    %s215 = sphi 0, %s201
    %s219 = sphi 0, %s219
    %s221 = sphi 0, %s219
    %s222 = sphi 0, %s221
    %s236 = sphi 0, %s222
    %s240 = sphi 0, %s240
    %s242 = sphi 0, %s240
    %s243 = sphi 0, %s242
    %s257 = sphi 0, %s243
    %s263 = sphi 0, %s265
    %s266 = sphi 0, %s263
    %s267 = sphi 0, %s266
    %s283 = sphi 0, %s267
  $region4: #{vae_encoder_forward.1} parent=0 // loop_header_branch
    %20 = sbr.rel (%p18) target = $region8
  $region5: #{vae_encoder_forward.1} parent=0 // loop_body
    %s22 = ssub.s32 %s17, 1
    %s23 = ssub.s32 %s17, 2
    %s24 = sadd.s32 %s17, 1
    %s25 = ssub.s32 %s17, %s24
    %p26 = scmp.eq.s32.totalorder %s25, 0
    %s28 = sadd.s32 %s27, 1
    %s29 = scalar_select %p26, %s27, %s28
    %p32 = pneg %p26
    %p33 = scmp.eq.s32.totalorder %s17, 3
    %p34 = por %p32, %p33
    %p35 = scmp.ne.s32.totalorder %s27, %s30
    %p36 = scmp.eq.s32.totalorder %s17, 0
    %p37 = por %p35, %p36
    %p38 = scmp.ne.s32.totalorder %s27, %s30
    %p39 = scmp.eq.s32.totalorder %s22, 3
    %p40 = por %p38, %p39
    %p41 = scmp.ne.s32.totalorder %s30, %s31
    %p42 = scmp.eq.s32.totalorder %s22, 0
    %p43 = por %p41, %p42
    %p44 = scmp.ne.s32.totalorder %s30, %s31
    %p45 = scmp.eq.s32.totalorder %s23, 3
    %p46 = por %p44, %p45
    %p48 = scmp.ne.s32.totalorder %s31, %s47
    %p49 = scmp.eq.s32.totalorder %s23, 0
    %p50 = por %p48, %p49
    %s52 = sadd.s32 %s51, 1
    %p55 = scmp.eq.s32.totalorder %s17, 3
    %p56 = scmp.ne.s32.totalorder %s51, %s53
    %p57 = scmp.eq.s32.totalorder %s17, 0
    %p58 = por %p56, %p57
    %p59 = scmp.ne.s32.totalorder %s51, %s53
    %p60 = scmp.eq.s32.totalorder %s22, 3
    %p61 = por %p59, %p60
    %p62 = scmp.ne.s32.totalorder %s53, %s54
    %p63 = scmp.eq.s32.totalorder %s22, 0
    %p64 = por %p62, %p63
    %p65 = scmp.ne.s32.totalorder %s53, %s54
    %p66 = scmp.eq.s32.totalorder %s23, 3
    %p67 = por %p65, %p66
    %p69 = scmp.ne.s32.totalorder %s54, %s68
    %p70 = scmp.eq.s32.totalorder %s23, 0
    %p71 = por %p69, %p70
    %s73 = sadd.s32 %s72, 1
    %p76 = scmp.eq.s32.totalorder %s17, 3
    %p77 = scmp.ne.s32.totalorder %s72, %s74
    %p78 = scmp.eq.s32.totalorder %s17, 0
    %p79 = por %p77, %p78
    %p80 = scmp.ne.s32.totalorder %s72, %s74
    %p81 = scmp.eq.s32.totalorder %s22, 3
    %p82 = por %p80, %p81
    %p83 = scmp.ne.s32.totalorder %s74, %s75
    %p84 = scmp.eq.s32.totalorder %s22, 0
    %p85 = por %p83, %p84
    %p86 = scmp.ne.s32.totalorder %s74, %s75
    %p87 = scmp.eq.s32.totalorder %s23, 3
    %p88 = por %p86, %p87
    %p90 = scmp.ne.s32.totalorder %s75, %s89
    %p91 = scmp.eq.s32.totalorder %s23, 0
    %p92 = por %p90, %p91
    %s94 = sadd.s32 %s93, 1
    %p97 = scmp.eq.s32.totalorder %s17, 3
    %p98 = scmp.ne.s32.totalorder %s93, %s95
    %p99 = scmp.eq.s32.totalorder %s17, 0
    %p100 = por %p98, %p99
    %p101 = scmp.ne.s32.totalorder %s93, %s95
    %p102 = scmp.eq.s32.totalorder %s22, 3
    %p103 = por %p101, %p102
    %p104 = scmp.ne.s32.totalorder %s95, %s96
    %p105 = scmp.eq.s32.totalorder %s22, 0
    %p106 = por %p104, %p105
    %p107 = scmp.ne.s32.totalorder %s95, %s96
    %p108 = scmp.eq.s32.totalorder %s23, 3
    %p109 = por %p107, %p108
    %p111 = scmp.ne.s32.totalorder %s96, %s110
    %p112 = scmp.eq.s32.totalorder %s23, 0
    %p113 = por %p111, %p112
    %s115 = sadd.s32 %s114, 1
    %p118 = scmp.eq.s32.totalorder %s17, 3
    %p119 = scmp.ne.s32.totalorder %s114, %s116
    %p120 = scmp.eq.s32.totalorder %s17, 0
    %p121 = por %p119, %p120
    %p122 = scmp.ne.s32.totalorder %s114, %s116
    %p123 = scmp.eq.s32.totalorder %s22, 3
    %p124 = por %p122, %p123
    %p125 = scmp.ne.s32.totalorder %s116, %s117
    %p126 = scmp.eq.s32.totalorder %s22, 0
    %p127 = por %p125, %p126
    %p128 = scmp.ne.s32.totalorder %s116, %s117
    %p129 = scmp.eq.s32.totalorder %s23, 3
    %p130 = por %p128, %p129
    %p132 = scmp.ne.s32.totalorder %s117, %s131
    %p133 = scmp.eq.s32.totalorder %s23, 0
    %p134 = por %p132, %p133
    %s136 = sadd.s32 %s135, 1
    %p139 = scmp.eq.s32.totalorder %s17, 3
    %p140 = scmp.ne.s32.totalorder %s135, %s137
    %p141 = scmp.eq.s32.totalorder %s17, 0
    %p142 = por %p140, %p141
    %p143 = scmp.ne.s32.totalorder %s135, %s137
    %p144 = scmp.eq.s32.totalorder %s22, 3
    %p145 = por %p143, %p144
    %p146 = scmp.ne.s32.totalorder %s137, %s138
    %p147 = scmp.eq.s32.totalorder %s22, 0
    %p148 = por %p146, %p147
    %p149 = scmp.ne.s32.totalorder %s137, %s138
    %p150 = scmp.eq.s32.totalorder %s23, 3
    %p151 = por %p149, %p150
    %p153 = scmp.ne.s32.totalorder %s138, %s152
    %p154 = scmp.eq.s32.totalorder %s23, 0
    %p155 = por %p153, %p154
    %s157 = sadd.s32 %s156, 1
    %p160 = scmp.eq.s32.totalorder %s17, 3
    %p161 = scmp.ne.s32.totalorder %s156, %s158
    %p162 = scmp.eq.s32.totalorder %s17, 0
    %p163 = por %p161, %p162
    %p164 = scmp.ne.s32.totalorder %s156, %s158
    %p165 = scmp.eq.s32.totalorder %s22, 3
    %p166 = por %p164, %p165
    %p167 = scmp.ne.s32.totalorder %s158, %s159
    %p168 = scmp.eq.s32.totalorder %s22, 0
    %p169 = por %p167, %p168
    %p170 = scmp.ne.s32.totalorder %s158, %s159
    %p171 = scmp.eq.s32.totalorder %s23, 3
    %p172 = por %p170, %p171
    %p174 = scmp.ne.s32.totalorder %s159, %s173
    %p175 = scmp.eq.s32.totalorder %s23, 0
    %p176 = por %p174, %p175
    %s178 = sadd.s32 %s177, 1
    %p181 = scmp.eq.s32.totalorder %s17, 3
    %p182 = scmp.ne.s32.totalorder %s177, %s179
    %p183 = scmp.eq.s32.totalorder %s17, 0
    %p184 = por %p182, %p183
    %p185 = scmp.ne.s32.totalorder %s177, %s179
    %p186 = scmp.eq.s32.totalorder %s22, 3
    %p187 = por %p185, %p186
    %p188 = scmp.ne.s32.totalorder %s179, %s180
    %p189 = scmp.eq.s32.totalorder %s22, 0
    %p190 = por %p188, %p189
    %p191 = scmp.ne.s32.totalorder %s179, %s180
    %p192 = scmp.eq.s32.totalorder %s23, 3
    %p193 = por %p191, %p192
    %p195 = scmp.ne.s32.totalorder %s180, %s194
    %p196 = scmp.eq.s32.totalorder %s23, 0
    %p197 = por %p195, %p196
    %s199 = sadd.s32 %s198, 1
    %p202 = scmp.eq.s32.totalorder %s17, 3
    %p203 = scmp.ne.s32.totalorder %s198, %s200
    %p204 = scmp.eq.s32.totalorder %s17, 0
    %p205 = por %p203, %p204
    %p206 = scmp.ne.s32.totalorder %s198, %s200
    %p207 = scmp.eq.s32.totalorder %s22, 3
    %p208 = por %p206, %p207
    %p209 = scmp.ne.s32.totalorder %s200, %s201
    %p210 = scmp.eq.s32.totalorder %s22, 0
    %p211 = por %p209, %p210
    %p212 = scmp.ne.s32.totalorder %s200, %s201
    %p213 = scmp.eq.s32.totalorder %s23, 3
    %p214 = por %p212, %p213
    %p216 = scmp.ne.s32.totalorder %s201, %s215
    %p217 = scmp.eq.s32.totalorder %s23, 0
    %p218 = por %p216, %p217
    %s220 = sadd.s32 %s219, 1
    %p223 = scmp.eq.s32.totalorder %s17, 3
    %p224 = scmp.ne.s32.totalorder %s219, %s221
    %p225 = scmp.eq.s32.totalorder %s17, 0
    %p226 = por %p224, %p225
    %p227 = scmp.ne.s32.totalorder %s219, %s221
    %p228 = scmp.eq.s32.totalorder %s22, 3
    %p229 = por %p227, %p228
    %p230 = scmp.ne.s32.totalorder %s221, %s222
    %p231 = scmp.eq.s32.totalorder %s22, 0
    %p232 = por %p230, %p231
    %p233 = scmp.ne.s32.totalorder %s221, %s222
    %p234 = scmp.eq.s32.totalorder %s23, 3
    %p235 = por %p233, %p234
    %p237 = scmp.ne.s32.totalorder %s222, %s236
    %p238 = scmp.eq.s32.totalorder %s23, 0
    %p239 = por %p237, %p238
    %s241 = sadd.s32 %s240, 1
    %p244 = scmp.eq.s32.totalorder %s17, 3
    %p245 = scmp.ne.s32.totalorder %s240, %s242
    %p246 = scmp.eq.s32.totalorder %s17, 0
    %p247 = por %p245, %p246
    %p248 = scmp.ne.s32.totalorder %s240, %s242
    %p249 = scmp.eq.s32.totalorder %s22, 3
    %p250 = por %p248, %p249
    %p251 = scmp.ne.s32.totalorder %s242, %s243
    %p252 = scmp.eq.s32.totalorder %s22, 0
    %p253 = por %p251, %p252
    %p254 = scmp.ne.s32.totalorder %s242, %s243
    %p255 = scmp.eq.s32.totalorder %s23, 3
    %p256 = por %p254, %p255
    %p258 = scmp.ne.s32.totalorder %s243, %s257
    %p259 = scmp.eq.s32.totalorder %s23, 0
    %p260 = por %p258, %p259
    %s261 = ssub.s32 %s17, %s24
    %p262 = scmp.eq.s32.totalorder %s261, 0
    %s264 = sadd.s32 %s263, 1
    %s265 = scalar_select %p262, %s263, %s264
    %p268 = pneg %p262
    %p269 = scmp.eq.s32.totalorder %s17, 3
    %p270 = por %p268, %p269
    %p271 = scmp.ne.s32.totalorder %s263, %s266
    %p272 = scmp.eq.s32.totalorder %s17, 0
    %p273 = por %p271, %p272
    %p274 = scmp.ne.s32.totalorder %s263, %s266
    %p275 = scmp.eq.s32.totalorder %s22, 3
    %p276 = por %p274, %p275
    %p277 = scmp.ne.s32.totalorder %s266, %s267
    %p278 = scmp.eq.s32.totalorder %s22, 0
    %p279 = por %p277, %p278
    %p280 = scmp.ne.s32.totalorder %s266, %s267
    %p281 = scmp.eq.s32.totalorder %s23, 3
    %p282 = por %p280, %p281
    %p284 = scmp.ne.s32.totalorder %s267, %s283
    %p285 = scmp.eq.s32.totalorder %s23, 0
    %p286 = por %p284, %p285
    %p287 = scmp.le.s32.totalorder 1, %s17
    %p288 = scmp.lt.s32.totalorder %s17, 5
    %p289 = pnand %p287, %p288
    %p290 = pneg %p289
    // Predicated region
    $region9: #{vae_encoder_forward.1} parent=5 // pred_check
      _
    $region10: #{vae_encoder_forward.1} parent=5 // pred_check_branch
      %292 = sbr.rel (%p289) target = $region12
    $region11: #{vae_encoder_forward.1} parent=5 // pred_region
      %s293 = ssub.s32 %s17, 1
      // Predicated region
      $region13: #{vae_encoder_forward.1} parent=11 // pred_check
        %p294 = pneg %p64
      $region14: #{vae_encoder_forward.1} parent=11 // pred_check_branch
        %296 = sbr.rel (%p294) target = $region16
      $region15: #{vae_encoder_forward.1} parent=11 // pred_region
        _
      $region16: #{vae_encoder_forward.1} parent=11 // pred_fallthru
        _
      // Predicated region
      $region17: #{vae_encoder_forward.1} parent=11 // pred_check
        %p297 = pneg %p85
      $region18: #{vae_encoder_forward.1} parent=11 // pred_check_branch
        %299 = sbr.rel (%p297) target = $region20
      $region19: #{vae_encoder_forward.1} parent=11 // pred_region
        _
      $region20: #{vae_encoder_forward.1} parent=11 // pred_fallthru
        _
      // Predicated region
      $region21: #{vae_encoder_forward.1} parent=11 // pred_check
        %p300 = pneg %p106
      $region22: #{vae_encoder_forward.1} parent=11 // pred_check_branch
        %302 = sbr.rel (%p300) target = $region24
      $region23: #{vae_encoder_forward.1} parent=11 // pred_region
        _
      $region24: #{vae_encoder_forward.1} parent=11 // pred_fallthru
        _
      // Predicated region
      $region25: #{vae_encoder_forward.1} parent=11 // pred_check
        %p303 = pneg %p127
      $region26: #{vae_encoder_forward.1} parent=11 // pred_check_branch
        %305 = sbr.rel (%p303) target = $region28
      $region27: #{vae_encoder_forward.1} parent=11 // pred_region
        _
      $region28: #{vae_encoder_forward.1} parent=11 // pred_fallthru
        _
      // Predicated region
      $region29: #{vae_encoder_forward.1} parent=11 // pred_check
        %p306 = pneg %p148
      $region30: #{vae_encoder_forward.1} parent=11 // pred_check_branch
        %308 = sbr.rel (%p306) target = $region32
      $region31: #{vae_encoder_forward.1} parent=11 // pred_region
        _
      $region32: #{vae_encoder_forward.1} parent=11 // pred_fallthru
        _
      // Predicated region
      $region33: #{vae_encoder_forward.1} parent=11 // pred_check
        %p309 = pneg %p169
      $region34: #{vae_encoder_forward.1} parent=11 // pred_check_branch
        %311 = sbr.rel (%p309) target = $region36
      $region35: #{vae_encoder_forward.1} parent=11 // pred_region
        _
      $region36: #{vae_encoder_forward.1} parent=11 // pred_fallthru
        _
      // Predicated region
      $region37: #{vae_encoder_forward.1} parent=11 // pred_check
        %p312 = pneg %p190
      $region38: #{vae_encoder_forward.1} parent=11 // pred_check_branch
        %314 = sbr.rel (%p312) target = $region40
      $region39: #{vae_encoder_forward.1} parent=11 // pred_region
        _
      $region40: #{vae_encoder_forward.1} parent=11 // pred_fallthru
        _
      // Predicated region
      $region41: #{vae_encoder_forward.1} parent=11 // pred_check
        %p315 = pneg %p211
      $region42: #{vae_encoder_forward.1} parent=11 // pred_check_branch
        %317 = sbr.rel (%p315) target = $region44
      $region43: #{vae_encoder_forward.1} parent=11 // pred_region
        _
      $region44: #{vae_encoder_forward.1} parent=11 // pred_fallthru
        _
      // Predicated region
      $region45: #{vae_encoder_forward.1} parent=11 // pred_check
        %p318 = pneg %p232
      $region46: #{vae_encoder_forward.1} parent=11 // pred_check_branch
        %320 = sbr.rel (%p318) target = $region48
      $region47: #{vae_encoder_forward.1} parent=11 // pred_region
        _
      $region48: #{vae_encoder_forward.1} parent=11 // pred_fallthru
        _
      // Predicated region
      $region49: #{vae_encoder_forward.1} parent=11 // pred_check
        %p321 = pneg %p253
      $region50: #{vae_encoder_forward.1} parent=11 // pred_check_branch
        %323 = sbr.rel (%p321) target = $region52
      $region51: #{vae_encoder_forward.1} parent=11 // pred_region
        _
      $region52: #{vae_encoder_forward.1} parent=11 // pred_fallthru
        _
    $region12: #{vae_encoder_forward.1} parent=5 // pred_fallthru
      _
    %p324 = scmp.lt.s32.totalorder %s17, 4
    // Predicated region
    $region53: #{vae_encoder_forward.1} parent=5 // pred_check
      %p325 = pneg %p324
    $region54: #{vae_encoder_forward.1} parent=5 // pred_check_branch
      %327 = sbr.rel (%p325) target = $region56
    $region55: #{vae_encoder_forward.1} parent=5 // pred_region
      // Predicated region
      $region57: #{vae_encoder_forward.1} parent=55 // pred_check
        %p328 = pneg %p37
      $region58: #{vae_encoder_forward.1} parent=55 // pred_check_branch
        %330 = sbr.rel (%p328) target = $region60
      $region59: #{vae_encoder_forward.1} parent=55 // pred_region
        %s331 = smul.u32 16, %s17
        %p332 = scmp.lt.s32.totalorder %s331, 63
        %s333 = scalar_select %p332, %s331, 63
        %s334 = smul.addr %s333, 8
        %s335 = scalar_lea.vmem %s0, %s334
        %s336 = smul.u32 16, %s17
      $region60: #{vae_encoder_forward.1} parent=55 // pred_fallthru
        _
    $region56: #{vae_encoder_forward.1} parent=5 // pred_fallthru
      _
    %p337 = scmp.le.s32.totalorder 1, %s17
    %p338 = scmp.lt.s32.totalorder %s17, 5
    %p339 = pnand %p337, %p338
    %p340 = pneg %p339
    // Predicated region
    $region61: #{vae_encoder_forward.1} parent=5 // pred_check
      _
    $region62: #{vae_encoder_forward.1} parent=5 // pred_check_branch
      %342 = sbr.rel (%p339) target = $region64
    $region63: #{vae_encoder_forward.1} parent=5 // pred_region
      %s343 = ssub.s32 %s17, 1
      %s344 = smul.u32 16, %s22
      %p345 = scmp.lt.s32.totalorder %s344, 63
      %s346 = scalar_select %p345, %s344, 63
      %s347 = smul.addr %s346, 8
      %s348 = scalar_lea.vmem %s0, %s347
      %p349 = pneg %p43
      %p350 = pneg %p40
      %p351 = pneg %p64
      %p352 = pneg %p61
      %p353 = pneg %p85
      %p354 = pneg %p82
      %p355 = pneg %p106
      %p356 = pneg %p103
      %p357 = pneg %p127
      %p358 = pneg %p124
      %p359 = pneg %p148
      %p360 = pneg %p145
      %p361 = pneg %p169
      %p362 = pneg %p166
      %p363 = pneg %p190
      %p364 = pneg %p187
      %p365 = pneg %p211
      %p366 = pneg %p208
      %p367 = pneg %p232
      %p368 = pneg %p229
      %p369 = pneg %p253
      %p370 = pneg %p250
      %p371 = pneg %p279
      %p372 = pneg %p276
      %s373 = smul.u32 16, %s22
      %p374 = scmp.lt.s32.totalorder %s373, 63
      %s375 = scalar_select %p374, %s373, 63
      %s376 = smul.addr %s375, 8
      %s377 = scalar_lea.vmem %s11, %s376
      %s378 = smul.u32 16, %s22
      %p379 = scmp.lt.s32.totalorder %s378, 63
      %s380 = scalar_select %p379, %s378, 63
      %s381 = smul.addr %s380, 8
      %s382 = scalar_lea.vmem %s0, %s381
      %s383 = smul.u32 16, %s22
      %s384 = smul.u32 16, %s22
      %p385 = scmp.lt.s32.totalorder %s384, 63
      %s386 = scalar_select %p385, %s384, 63
      %s387 = smul.addr %s386, 8
      %s388 = scalar_lea.vmem %s11, %s387
      %s389 = smul.u32 16, %s22
      %v390 = vld [vmem:[%s382] sm:$0xff]
      %v391 = vld [vmem:[%s382 + $0x8] sm:$0xff]
      %v392 = vld [vmem:[%s382 + $0x10] sm:$0xff]
      %v393 = vld [vmem:[%s382 + $0x18] sm:$0xff]
      %v394 = vld [vmem:[%s382 + $0x20] sm:$0xff]
      %v395 = vld [vmem:[%s382 + $0x28] sm:$0xff]
      %v396 = vld [vmem:[%s382 + $0x30] sm:$0xff]
      %v397 = vld [vmem:[%s382 + $0x38] sm:$0xff]
      %v398 = vld [vmem:[%s382 + $0x40] sm:$0xff]
      %v399 = vld [vmem:[%s382 + $0x48] sm:$0xff]
      %v400 = vld [vmem:[%s382 + $0x50] sm:$0xff]
      %v401 = vld [vmem:[%s382 + $0x58] sm:$0xff]
      %v402 = vld [vmem:[%s382 + $0x60] sm:$0xff]
      %v403 = vld [vmem:[%s382 + $0x68] sm:$0xff]
      %v404 = vld [vmem:[%s382 + $0x70] sm:$0xff]
      %v405 = vld [vmem:[%s382 + $0x78] sm:$0xff]
      %v406 = vld [vmem:[%s1] sm:$0xff]
      %v407 = vld [vmem:[%s1 + $0x8] sm:$0xff]
      %v408 = vld [vmem:[%s1 + $0x10] sm:$0xff]
      %v409 = vld [vmem:[%s1 + $0x18] sm:$0xff]
      %v410 = vld [vmem:[%s2] sm:$0x1]
      %v412 = vlaneseq
      %v413 = vshrl.u32 %v412, 7
      %v414 = vsub.s32 0, %v413
      %v415 = vrot.slane %v410, %v414
      %vm417 = vcmask 261120
      %v419 = vsel %vm417, %v390, 0
      %v422 = vsel %vm417, %v391, 0
      %v425 = vsel %vm417, %v392, 0
      %v428 = vsel %vm417, %v393, 0
      %v431 = vsel %vm417, %v394, 0
      %v434 = vsel %vm417, %v395, 0
      %v437 = vsel %vm417, %v396, 0
      %v440 = vsel %vm417, %v397, 0
      %v443 = vsel %vm417, %v398, 0
      %v446 = vsel %vm417, %v399, 0
      %v449 = vsel %vm417, %v400, 0
      %v452 = vsel %vm417, %v401, 0
      %v455 = vsel %vm417, %v402, 0
      %v458 = vsel %vm417, %v403, 0
      %v461 = vsel %vm417, %v404, 0
      %v464 = vsel %vm417, %v405, 0
      %466 = vmatprep.subr.mxu0 0.0
      %467 = vmatpush1.msra.mxu0 0.0
      %468 = vmatprep.subr.mxu0 0.0
      %469 = vmatpush1.msra.mxu0 0.0
      %470 = vmatprep.subr.mxu0 0.0
      %471 = vmatpush1.msra.mxu0 0.0
      %472 = vmatprep.subr.mxu0 0.0
      %473 = vmatpush1.msra.mxu0 0.0
      %474 = vmatprep.subr.mxu0 0.0
      %475 = vmatpush1.msra.mxu0 0.0
      %476 = vmatprep.subr.mxu0 0.0
      %477 = vmatpush1.msra.mxu0 0.0
      %478 = vmatprep.subr.mxu0 0.0
      %479 = vmatpush1.msra.mxu0 0.0
      %480 = vmatprep.subr.mxu0 0.0
      %481 = vmatpush1.msra.mxu0 0.0
      %482 = vmatprep.subr.mxu0 0.0
      %483 = vmatpush1.msra.mxu0 0.0
      %484 = vmatprep.subr.mxu0 0.0
      %485 = vmatpush1.msra.mxu0 0.0
      %486 = vmatprep.subr.mxu0 0.0
      %487 = vmatpush1.msra.mxu0 0.0
      %488 = vmatprep.subr.mxu0 0.0
      %489 = vmatpush1.msra.mxu0 0.0
      %490 = vmatprep.subr.mxu0 0.0
      %491 = vmatpush1.msra.mxu0 %v409
      %492 = vmatprep.subr.mxu0 0.0
      %493 = vmatpush1.msra.mxu0 %v408
      %494 = vmatprep.subr.mxu0 0.0
      %495 = vmatpush1.msra.mxu0 %v407
      %496 = vmatprep.subr.mxu0 0.0
      %497 = vmatpush1.msra.mxu0 %v406
      %498 = vmatprep.subr.mxu0 0.0
      %499 = vmatpush2.msra.mxu0 0.0
      %500 = vmatprep.subr.mxu0 0.0
      %501 = vmatpush2.msra.mxu0 0.0
      %502 = vmatprep.subr.mxu0 0.0
      %503 = vmatpush2.msra.mxu0 0.0
      %504 = vmatprep.subr.mxu0 0.0
      %505 = vmatpush2.msra.mxu0 0.0
      %506 = vmatprep.subr.mxu0 0.0
      %507 = vmatpush2.msra.mxu0 0.0
      %508 = vmatprep.subr.mxu0 0.0
      %509 = vmatpush2.msra.mxu0 0.0
      %510 = vmatprep.subr.mxu0 0.0
      %511 = vmatpush2.msra.mxu0 0.0
      %512 = vmatprep.subr.mxu0 0.0
      %513 = vmatpush2.msra.mxu0 0.0
      %514 = vmatprep.subr.mxu0 0.0
      %515 = vmatpush2.msra.mxu0 0.0
      %516 = vmatprep.subr.mxu0 0.0
      %517 = vmatpush2.msra.mxu0 0.0
      %518 = vmatprep.subr.mxu0 0.0
      %519 = vmatpush2.msra.mxu0 0.0
      %520 = vmatprep.subr.mxu0 0.0
      %521 = vmatpush2.msra.mxu0 0.0
      %522 = vmatprep.subr.mxu0 0.0
      %523 = vmatpush2.msra.mxu0 0.0
      %524 = vmatprep.subr.mxu0 0.0
      %525 = vmatpush2.msra.mxu0 0.0
      %526 = vmatprep.subr.mxu0 0.0
      %527 = vmatpush2.msra.mxu0 0.0
      %528 = vmatprep.subr.mxu0 0.0
      %529 = vmatpush2.msra.mxu0 0.0
      %530 = vmatprep.mubr.f32.mxu0 0.0
      %531 = vmatmul.mubr.f32.gmra.mxu0 %v419
      %v532 = vpop.f32.mrf.mxu0
      %v533 = vadd.f32 %v415, %v532
      %v534 = vpop.f32.mrf.mxu0
      %535 = vmatprep.mubr.f32.mxu0 0.0
      %536 = vmatmul.mubr.f32.gmra.mxu0 %v422
      %v537 = vpop.f32.mrf.mxu0
      %v538 = vadd.f32 %v415, %v537
      %v539 = vpop.f32.mrf.mxu0
      %540 = vmatprep.mubr.f32.mxu0 0.0
      %541 = vmatmul.mubr.f32.gmra.mxu0 %v425
      %v542 = vpop.f32.mrf.mxu0
      %v543 = vadd.f32 %v415, %v542
      %v544 = vpop.f32.mrf.mxu0
      %545 = vmatprep.mubr.f32.mxu0 0.0
      %546 = vmatmul.mubr.f32.gmra.mxu0 %v428
      %v547 = vpop.f32.mrf.mxu0
      %v548 = vadd.f32 %v415, %v547
      %v549 = vpop.f32.mrf.mxu0
      %550 = vmatprep.mubr.f32.mxu0 0.0
      %551 = vmatmul.mubr.f32.gmra.mxu0 %v431
      %v552 = vpop.f32.mrf.mxu0
      %v553 = vadd.f32 %v415, %v552
      %v554 = vpop.f32.mrf.mxu0
      %555 = vmatprep.mubr.f32.mxu0 0.0
      %556 = vmatmul.mubr.f32.gmra.mxu0 %v434
      %v557 = vpop.f32.mrf.mxu0
      %v558 = vadd.f32 %v415, %v557
      %v559 = vpop.f32.mrf.mxu0
      %560 = vmatprep.mubr.f32.mxu0 0.0
      %561 = vmatmul.mubr.f32.gmra.mxu0 %v437
      %v562 = vpop.f32.mrf.mxu0
      %v563 = vadd.f32 %v415, %v562
      %v564 = vpop.f32.mrf.mxu0
      %565 = vmatprep.mubr.f32.mxu0 0.0
      %566 = vmatmul.mubr.f32.gmra.mxu0 %v440
      %v567 = vpop.f32.mrf.mxu0
      %v568 = vadd.f32 %v415, %v567
      %v569 = vpop.f32.mrf.mxu0
      %570 = vmatprep.mubr.f32.mxu0 0.0
      %571 = vmatmul.mubr.f32.gmra.mxu0 %v443
      %v572 = vpop.f32.mrf.mxu0
      %v573 = vadd.f32 %v415, %v572
      %v574 = vpop.f32.mrf.mxu0
      %575 = vmatprep.mubr.f32.mxu0 0.0
      %576 = vmatmul.mubr.f32.gmra.mxu0 %v446
      %v577 = vpop.f32.mrf.mxu0
      %v578 = vadd.f32 %v415, %v577
      %v579 = vpop.f32.mrf.mxu0
      %580 = vmatprep.mubr.f32.mxu0 0.0
      %581 = vmatmul.mubr.f32.gmra.mxu0 %v449
      %v582 = vpop.f32.mrf.mxu0
      %v583 = vadd.f32 %v415, %v582
      %v584 = vpop.f32.mrf.mxu0
      %585 = vmatprep.mubr.f32.mxu0 0.0
      %586 = vmatmul.mubr.f32.gmra.mxu0 %v452
      %v587 = vpop.f32.mrf.mxu0
      %v588 = vadd.f32 %v415, %v587
      %v589 = vpop.f32.mrf.mxu0
      %590 = vmatprep.mubr.f32.mxu0 0.0
      %591 = vmatmul.mubr.f32.gmra.mxu0 %v455
      %v592 = vpop.f32.mrf.mxu0
      %v593 = vadd.f32 %v415, %v592
      %v594 = vpop.f32.mrf.mxu0
      %595 = vmatprep.mubr.f32.mxu0 0.0
      %596 = vmatmul.mubr.f32.gmra.mxu0 %v458
      %v597 = vpop.f32.mrf.mxu0
      %v598 = vadd.f32 %v415, %v597
      %v599 = vpop.f32.mrf.mxu0
      %600 = vmatprep.mubr.f32.mxu0 0.0
      %601 = vmatmul.mubr.f32.gmra.mxu0 %v461
      %v602 = vpop.f32.mrf.mxu0
      %v603 = vadd.f32 %v415, %v602
      %v604 = vpop.f32.mrf.mxu0
      %605 = vmatprep.mubr.f32.mxu0 0.0
      %606 = vmatmul.mubr.f32.gmra.mxu0 %v464
      %v607 = vpop.f32.mrf.mxu0
      %v608 = vadd.f32 %v415, %v607
      %v609 = vpop.f32.mrf.mxu0
      %610 = vdwg.mxu0
      %v611 = vmax.f32 %v533, 0.0
      %v612 = vmax.f32 %v538, 0.0
      %v613 = vmax.f32 %v543, 0.0
      %v614 = vmax.f32 %v548, 0.0
      %v615 = vmax.f32 %v553, 0.0
      %v616 = vmax.f32 %v558, 0.0
      %v617 = vmax.f32 %v563, 0.0
      %v618 = vmax.f32 %v568, 0.0
      %v619 = vmax.f32 %v573, 0.0
      %v620 = vmax.f32 %v578, 0.0
      %v621 = vmax.f32 %v583, 0.0
      %v622 = vmax.f32 %v588, 0.0
      %v623 = vmax.f32 %v593, 0.0
      %v624 = vmax.f32 %v598, 0.0
      %v625 = vmax.f32 %v603, 0.0
      %v626 = vmax.f32 %v608, 0.0
      %v627 = vld [vmem:[%s3] sm:$0xff]
      %v628 = vld [vmem:[%s3 + $0x8] sm:$0xff]
      %v629 = vld [vmem:[%s3 + $0x10] sm:$0xff]
      %v630 = vld [vmem:[%s3 + $0x18] sm:$0xff]
      %v631 = vld [vmem:[%s3 + $0x20] sm:$0xff]
      %v632 = vld [vmem:[%s3 + $0x28] sm:$0xff]
      %v633 = vld [vmem:[%s3 + $0x30] sm:$0xff]
      %v634 = vld [vmem:[%s3 + $0x38] sm:$0xff]
      %v635 = vld [vmem:[%s4] sm:$0x1]
      %v637 = vlaneseq
      %v638 = vshrl.u32 %v637, 7
      %v639 = vsub.s32 0, %v638
      %v640 = vrot.slane %v635, %v639
      %vm642 = vcmask 523264
      %v644 = vsel %vm642, %v611, 0
      %v647 = vsel %vm642, %v612, 0
      %v650 = vsel %vm642, %v613, 0
      %v653 = vsel %vm642, %v614, 0
      %v656 = vsel %vm642, %v615, 0
      %v659 = vsel %vm642, %v616, 0
      %v662 = vsel %vm642, %v617, 0
      %v665 = vsel %vm642, %v618, 0
      %v668 = vsel %vm642, %v619, 0
      %v671 = vsel %vm642, %v620, 0
      %v674 = vsel %vm642, %v621, 0
      %v677 = vsel %vm642, %v622, 0
      %v680 = vsel %vm642, %v623, 0
      %v683 = vsel %vm642, %v624, 0
      %v686 = vsel %vm642, %v625, 0
      %v689 = vsel %vm642, %v626, 0
      %691 = vmatprep.subr.mxu0 0.0
      %692 = vmatpush1.msra.mxu0 0.0
      %693 = vmatprep.subr.mxu0 0.0
      %694 = vmatpush1.msra.mxu0 0.0
      %695 = vmatprep.subr.mxu0 0.0
      %696 = vmatpush1.msra.mxu0 0.0
      %697 = vmatprep.subr.mxu0 0.0
      %698 = vmatpush1.msra.mxu0 0.0
      %699 = vmatprep.subr.mxu0 0.0
      %700 = vmatpush1.msra.mxu0 0.0
      %701 = vmatprep.subr.mxu0 0.0
      %702 = vmatpush1.msra.mxu0 0.0
      %703 = vmatprep.subr.mxu0 0.0
      %704 = vmatpush1.msra.mxu0 0.0
      %705 = vmatprep.subr.mxu0 0.0
      %706 = vmatpush1.msra.mxu0 0.0
      %707 = vmatprep.subr.mxu0 0.0
      %708 = vmatpush1.msra.mxu0 %v634
      %709 = vmatprep.subr.mxu0 0.0
      %710 = vmatpush1.msra.mxu0 %v633
      %711 = vmatprep.subr.mxu0 0.0
      %712 = vmatpush1.msra.mxu0 %v632
      %713 = vmatprep.subr.mxu0 0.0
      %714 = vmatpush1.msra.mxu0 %v631
      %715 = vmatprep.subr.mxu0 0.0
      %716 = vmatpush1.msra.mxu0 %v630
      %717 = vmatprep.subr.mxu0 0.0
      %718 = vmatpush1.msra.mxu0 %v629
      %719 = vmatprep.subr.mxu0 0.0
      %720 = vmatpush1.msra.mxu0 %v628
      %721 = vmatprep.subr.mxu0 0.0
      %722 = vmatpush1.msra.mxu0 %v627
      %723 = vmatprep.subr.mxu0 0.0
      %724 = vmatpush2.msra.mxu0 0.0
      %725 = vmatprep.subr.mxu0 0.0
      %726 = vmatpush2.msra.mxu0 0.0
      %727 = vmatprep.subr.mxu0 0.0
      %728 = vmatpush2.msra.mxu0 0.0
      %729 = vmatprep.subr.mxu0 0.0
      %730 = vmatpush2.msra.mxu0 0.0
      %731 = vmatprep.subr.mxu0 0.0
      %732 = vmatpush2.msra.mxu0 0.0
      %733 = vmatprep.subr.mxu0 0.0
      %734 = vmatpush2.msra.mxu0 0.0
      %735 = vmatprep.subr.mxu0 0.0
      %736 = vmatpush2.msra.mxu0 0.0
      %737 = vmatprep.subr.mxu0 0.0
      %738 = vmatpush2.msra.mxu0 0.0
      %739 = vmatprep.subr.mxu0 0.0
      %740 = vmatpush2.msra.mxu0 0.0
      %741 = vmatprep.subr.mxu0 0.0
      %742 = vmatpush2.msra.mxu0 0.0
      %743 = vmatprep.subr.mxu0 0.0
      %744 = vmatpush2.msra.mxu0 0.0
      %745 = vmatprep.subr.mxu0 0.0
      %746 = vmatpush2.msra.mxu0 0.0
      %747 = vmatprep.subr.mxu0 0.0
      %748 = vmatpush2.msra.mxu0 0.0
      %749 = vmatprep.subr.mxu0 0.0
      %750 = vmatpush2.msra.mxu0 0.0
      %751 = vmatprep.subr.mxu0 0.0
      %752 = vmatpush2.msra.mxu0 0.0
      %753 = vmatprep.subr.mxu0 0.0
      %754 = vmatpush2.msra.mxu0 0.0
      %755 = vmatprep.mubr.f32.mxu0 0.0
      %756 = vmatmul.mubr.f32.gmra.mxu0 %v644
      %v757 = vpop.f32.mrf.mxu0
      %v758 = vadd.f32 %v640, %v757
      %v759 = vpop.f32.mrf.mxu0
      %760 = vmatprep.mubr.f32.mxu0 0.0
      %761 = vmatmul.mubr.f32.gmra.mxu0 %v647
      %v762 = vpop.f32.mrf.mxu0
      %v763 = vadd.f32 %v640, %v762
      %v764 = vpop.f32.mrf.mxu0
      %765 = vmatprep.mubr.f32.mxu0 0.0
      %766 = vmatmul.mubr.f32.gmra.mxu0 %v650
      %v767 = vpop.f32.mrf.mxu0
      %v768 = vadd.f32 %v640, %v767
      %v769 = vpop.f32.mrf.mxu0
      %770 = vmatprep.mubr.f32.mxu0 0.0
      %771 = vmatmul.mubr.f32.gmra.mxu0 %v653
      %v772 = vpop.f32.mrf.mxu0
      %v773 = vadd.f32 %v640, %v772
      %v774 = vpop.f32.mrf.mxu0
      %775 = vmatprep.mubr.f32.mxu0 0.0
      %776 = vmatmul.mubr.f32.gmra.mxu0 %v656
      %v777 = vpop.f32.mrf.mxu0
      %v778 = vadd.f32 %v640, %v777
      %v779 = vpop.f32.mrf.mxu0
      %780 = vmatprep.mubr.f32.mxu0 0.0
      %781 = vmatmul.mubr.f32.gmra.mxu0 %v659
      %v782 = vpop.f32.mrf.mxu0
      %v783 = vadd.f32 %v640, %v782
      %v784 = vpop.f32.mrf.mxu0
      %785 = vmatprep.mubr.f32.mxu0 0.0
      %786 = vmatmul.mubr.f32.gmra.mxu0 %v662
      %v787 = vpop.f32.mrf.mxu0
      %v788 = vadd.f32 %v640, %v787
      %v789 = vpop.f32.mrf.mxu0
      %790 = vmatprep.mubr.f32.mxu0 0.0
      %791 = vmatmul.mubr.f32.gmra.mxu0 %v665
      %v792 = vpop.f32.mrf.mxu0
      %v793 = vadd.f32 %v640, %v792
      %v794 = vpop.f32.mrf.mxu0
      %795 = vmatprep.mubr.f32.mxu0 0.0
      %796 = vmatmul.mubr.f32.gmra.mxu0 %v668
      %v797 = vpop.f32.mrf.mxu0
      %v798 = vadd.f32 %v640, %v797
      %v799 = vpop.f32.mrf.mxu0
      %800 = vmatprep.mubr.f32.mxu0 0.0
      %801 = vmatmul.mubr.f32.gmra.mxu0 %v671
      %v802 = vpop.f32.mrf.mxu0
      %v803 = vadd.f32 %v640, %v802
      %v804 = vpop.f32.mrf.mxu0
      %805 = vmatprep.mubr.f32.mxu0 0.0
      %806 = vmatmul.mubr.f32.gmra.mxu0 %v674
      %v807 = vpop.f32.mrf.mxu0
      %v808 = vadd.f32 %v640, %v807
      %v809 = vpop.f32.mrf.mxu0
      %810 = vmatprep.mubr.f32.mxu0 0.0
      %811 = vmatmul.mubr.f32.gmra.mxu0 %v677
      %v812 = vpop.f32.mrf.mxu0
      %v813 = vadd.f32 %v640, %v812
      %v814 = vpop.f32.mrf.mxu0
      %815 = vmatprep.mubr.f32.mxu0 0.0
      %816 = vmatmul.mubr.f32.gmra.mxu0 %v680
      %v817 = vpop.f32.mrf.mxu0
      %v818 = vadd.f32 %v640, %v817
      %v819 = vpop.f32.mrf.mxu0
      %820 = vmatprep.mubr.f32.mxu0 0.0
      %821 = vmatmul.mubr.f32.gmra.mxu0 %v683
      %v822 = vpop.f32.mrf.mxu0
      %v823 = vadd.f32 %v640, %v822
      %v824 = vpop.f32.mrf.mxu0
      %825 = vmatprep.mubr.f32.mxu0 0.0
      %826 = vmatmul.mubr.f32.gmra.mxu0 %v686
      %v827 = vpop.f32.mrf.mxu0
      %v828 = vadd.f32 %v640, %v827
      %v829 = vpop.f32.mrf.mxu0
      %830 = vmatprep.mubr.f32.mxu0 0.0
      %831 = vmatmul.mubr.f32.gmra.mxu0 %v689
      %v832 = vpop.f32.mrf.mxu0
      %v833 = vadd.f32 %v640, %v832
      %v834 = vpop.f32.mrf.mxu0
      %835 = vdwg.mxu0
      %v836 = vmax.f32 %v758, 0.0
      %v837 = vmax.f32 %v763, 0.0
      %v838 = vmax.f32 %v768, 0.0
      %v839 = vmax.f32 %v773, 0.0
      %v840 = vmax.f32 %v778, 0.0
      %v841 = vmax.f32 %v783, 0.0
      %v842 = vmax.f32 %v788, 0.0
      %v843 = vmax.f32 %v793, 0.0
      %v844 = vmax.f32 %v798, 0.0
      %v845 = vmax.f32 %v803, 0.0
      %v846 = vmax.f32 %v808, 0.0
      %v847 = vmax.f32 %v813, 0.0
      %v848 = vmax.f32 %v818, 0.0
      %v849 = vmax.f32 %v823, 0.0
      %v850 = vmax.f32 %v828, 0.0
      %v851 = vmax.f32 %v833, 0.0
      %v852 = vld [vmem:[%s5] sm:$0xff]
      %v853 = vld [vmem:[%s5 + $0x8] sm:$0xff]
      %v854 = vld [vmem:[%s5 + $0x10] sm:$0xff]
      %v855 = vld [vmem:[%s5 + $0x18] sm:$0xff]
      %v856 = vld [vmem:[%s5 + $0x20] sm:$0xff]
      %v857 = vld [vmem:[%s5 + $0x28] sm:$0xff]
      %v858 = vld [vmem:[%s5 + $0x30] sm:$0xff]
      %v859 = vld [vmem:[%s5 + $0x38] sm:$0xff]
      %v860 = vld [vmem:[%s6] sm:$0x1]
      %v862 = vlaneseq
      %v863 = vshrl.u32 %v862, 7
      %v864 = vsub.s32 0, %v863
      %v865 = vrot.slane %v860, %v864
      %v868 = vsel %vm642, %v836, 0
      %v871 = vsel %vm642, %v837, 0
      %v874 = vsel %vm642, %v838, 0
      %v877 = vsel %vm642, %v839, 0
      %v880 = vsel %vm642, %v840, 0
      %v883 = vsel %vm642, %v841, 0
      %v886 = vsel %vm642, %v842, 0
      %v889 = vsel %vm642, %v843, 0
      %v892 = vsel %vm642, %v844, 0
      %v895 = vsel %vm642, %v845, 0
      %v898 = vsel %vm642, %v846, 0
      %v901 = vsel %vm642, %v847, 0
      %v904 = vsel %vm642, %v848, 0
      %v907 = vsel %vm642, %v849, 0
      %v910 = vsel %vm642, %v850, 0
      %v913 = vsel %vm642, %v851, 0
      %915 = vmatprep.subr.mxu0 0.0
      %916 = vmatpush1.msra.mxu0 0.0
      %917 = vmatprep.subr.mxu0 0.0
      %918 = vmatpush1.msra.mxu0 0.0
      %919 = vmatprep.subr.mxu0 0.0
      %920 = vmatpush1.msra.mxu0 0.0
      %921 = vmatprep.subr.mxu0 0.0
      %922 = vmatpush1.msra.mxu0 0.0
      %923 = vmatprep.subr.mxu0 0.0
      %924 = vmatpush1.msra.mxu0 0.0
      %925 = vmatprep.subr.mxu0 0.0
      %926 = vmatpush1.msra.mxu0 0.0
      %927 = vmatprep.subr.mxu0 0.0
      %928 = vmatpush1.msra.mxu0 0.0
      %929 = vmatprep.subr.mxu0 0.0
      %930 = vmatpush1.msra.mxu0 0.0
      %931 = vmatprep.subr.mxu0 0.0
      %932 = vmatpush1.msra.mxu0 %v859
      %933 = vmatprep.subr.mxu0 0.0
      %934 = vmatpush1.msra.mxu0 %v858
      %935 = vmatprep.subr.mxu0 0.0
      %936 = vmatpush1.msra.mxu0 %v857
      %937 = vmatprep.subr.mxu0 0.0
      %938 = vmatpush1.msra.mxu0 %v856
      %939 = vmatprep.subr.mxu0 0.0
      %940 = vmatpush1.msra.mxu0 %v855
      %941 = vmatprep.subr.mxu0 0.0
      %942 = vmatpush1.msra.mxu0 %v854
      %943 = vmatprep.subr.mxu0 0.0
      %944 = vmatpush1.msra.mxu0 %v853
      %945 = vmatprep.subr.mxu0 0.0
      %946 = vmatpush1.msra.mxu0 %v852
      %947 = vmatprep.subr.mxu0 0.0
      %948 = vmatpush2.msra.mxu0 0.0
      %949 = vmatprep.subr.mxu0 0.0
      %950 = vmatpush2.msra.mxu0 0.0
      %951 = vmatprep.subr.mxu0 0.0
      %952 = vmatpush2.msra.mxu0 0.0
      %953 = vmatprep.subr.mxu0 0.0
      %954 = vmatpush2.msra.mxu0 0.0
      %955 = vmatprep.subr.mxu0 0.0
      %956 = vmatpush2.msra.mxu0 0.0
      %957 = vmatprep.subr.mxu0 0.0
      %958 = vmatpush2.msra.mxu0 0.0
      %959 = vmatprep.subr.mxu0 0.0
      %960 = vmatpush2.msra.mxu0 0.0
      %961 = vmatprep.subr.mxu0 0.0
      %962 = vmatpush2.msra.mxu0 0.0
      %963 = vmatprep.subr.mxu0 0.0
      %964 = vmatpush2.msra.mxu0 0.0
      %965 = vmatprep.subr.mxu0 0.0
      %966 = vmatpush2.msra.mxu0 0.0
      %967 = vmatprep.subr.mxu0 0.0
      %968 = vmatpush2.msra.mxu0 0.0
      %969 = vmatprep.subr.mxu0 0.0
      %970 = vmatpush2.msra.mxu0 0.0
      %971 = vmatprep.subr.mxu0 0.0
      %972 = vmatpush2.msra.mxu0 0.0
      %973 = vmatprep.subr.mxu0 0.0
      %974 = vmatpush2.msra.mxu0 0.0
      %975 = vmatprep.subr.mxu0 0.0
      %976 = vmatpush2.msra.mxu0 0.0
      %977 = vmatprep.subr.mxu0 0.0
      %978 = vmatpush2.msra.mxu0 0.0
      %979 = vmatprep.mubr.f32.mxu0 0.0
      %980 = vmatmul.mubr.f32.gmra.mxu0 %v868
      %v981 = vpop.f32.mrf.mxu0
      %v982 = vadd.f32 %v865, %v981
      %v983 = vpop.f32.mrf.mxu0
      %984 = vmatprep.mubr.f32.mxu0 0.0
      %985 = vmatmul.mubr.f32.gmra.mxu0 %v871
      %v986 = vpop.f32.mrf.mxu0
      %v987 = vadd.f32 %v865, %v986
      %v988 = vpop.f32.mrf.mxu0
      %989 = vmatprep.mubr.f32.mxu0 0.0
      %990 = vmatmul.mubr.f32.gmra.mxu0 %v874
      %v991 = vpop.f32.mrf.mxu0
      %v992 = vadd.f32 %v865, %v991
      %v993 = vpop.f32.mrf.mxu0
      %994 = vmatprep.mubr.f32.mxu0 0.0
      %995 = vmatmul.mubr.f32.gmra.mxu0 %v877
      %v996 = vpop.f32.mrf.mxu0
      %v997 = vadd.f32 %v865, %v996
      %v998 = vpop.f32.mrf.mxu0
      %999 = vmatprep.mubr.f32.mxu0 0.0
      %1000 = vmatmul.mubr.f32.gmra.mxu0 %v880
      %v1001 = vpop.f32.mrf.mxu0
      %v1002 = vadd.f32 %v865, %v1001
      %v1003 = vpop.f32.mrf.mxu0
      %1004 = vmatprep.mubr.f32.mxu0 0.0
      %1005 = vmatmul.mubr.f32.gmra.mxu0 %v883
      %v1006 = vpop.f32.mrf.mxu0
      %v1007 = vadd.f32 %v865, %v1006
      %v1008 = vpop.f32.mrf.mxu0
      %1009 = vmatprep.mubr.f32.mxu0 0.0
      %1010 = vmatmul.mubr.f32.gmra.mxu0 %v886
      %v1011 = vpop.f32.mrf.mxu0
      %v1012 = vadd.f32 %v865, %v1011
      %v1013 = vpop.f32.mrf.mxu0
      %1014 = vmatprep.mubr.f32.mxu0 0.0
      %1015 = vmatmul.mubr.f32.gmra.mxu0 %v889
      %v1016 = vpop.f32.mrf.mxu0
      %v1017 = vadd.f32 %v865, %v1016
      %v1018 = vpop.f32.mrf.mxu0
      %1019 = vmatprep.mubr.f32.mxu0 0.0
      %1020 = vmatmul.mubr.f32.gmra.mxu0 %v892
      %v1021 = vpop.f32.mrf.mxu0
      %v1022 = vadd.f32 %v865, %v1021
      %v1023 = vpop.f32.mrf.mxu0
      %1024 = vmatprep.mubr.f32.mxu0 0.0
      %1025 = vmatmul.mubr.f32.gmra.mxu0 %v895
      %v1026 = vpop.f32.mrf.mxu0
      %v1027 = vadd.f32 %v865, %v1026
      %v1028 = vpop.f32.mrf.mxu0
      %1029 = vmatprep.mubr.f32.mxu0 0.0
      %1030 = vmatmul.mubr.f32.gmra.mxu0 %v898
      %v1031 = vpop.f32.mrf.mxu0
      %v1032 = vadd.f32 %v865, %v1031
      %v1033 = vpop.f32.mrf.mxu0
      %1034 = vmatprep.mubr.f32.mxu0 0.0
      %1035 = vmatmul.mubr.f32.gmra.mxu0 %v901
      %v1036 = vpop.f32.mrf.mxu0
      %v1037 = vadd.f32 %v865, %v1036
      %v1038 = vpop.f32.mrf.mxu0
      %1039 = vmatprep.mubr.f32.mxu0 0.0
      %1040 = vmatmul.mubr.f32.gmra.mxu0 %v904
      %v1041 = vpop.f32.mrf.mxu0
      %v1042 = vadd.f32 %v865, %v1041
      %v1043 = vpop.f32.mrf.mxu0
      %1044 = vmatprep.mubr.f32.mxu0 0.0
      %1045 = vmatmul.mubr.f32.gmra.mxu0 %v907
      %v1046 = vpop.f32.mrf.mxu0
      %v1047 = vadd.f32 %v865, %v1046
      %v1048 = vpop.f32.mrf.mxu0
      %1049 = vmatprep.mubr.f32.mxu0 0.0
      %1050 = vmatmul.mubr.f32.gmra.mxu0 %v910
      %v1051 = vpop.f32.mrf.mxu0
      %v1052 = vadd.f32 %v865, %v1051
      %v1053 = vpop.f32.mrf.mxu0
      %1054 = vmatprep.mubr.f32.mxu0 0.0
      %1055 = vmatmul.mubr.f32.gmra.mxu0 %v913
      %v1056 = vpop.f32.mrf.mxu0
      %v1057 = vadd.f32 %v865, %v1056
      %v1058 = vpop.f32.mrf.mxu0
      %1059 = vdwg.mxu0
      %v1060 = vmax.f32 %v982, 0.0
      %v1061 = vmax.f32 %v987, 0.0
      %v1062 = vmax.f32 %v992, 0.0
      %v1063 = vmax.f32 %v997, 0.0
      %v1064 = vmax.f32 %v1002, 0.0
      %v1065 = vmax.f32 %v1007, 0.0
      %v1066 = vmax.f32 %v1012, 0.0
      %v1067 = vmax.f32 %v1017, 0.0
      %v1068 = vmax.f32 %v1022, 0.0
      %v1069 = vmax.f32 %v1027, 0.0
      %v1070 = vmax.f32 %v1032, 0.0
      %v1071 = vmax.f32 %v1037, 0.0
      %v1072 = vmax.f32 %v1042, 0.0
      %v1073 = vmax.f32 %v1047, 0.0
      %v1074 = vmax.f32 %v1052, 0.0
      %v1075 = vmax.f32 %v1057, 0.0
      %v1076 = vld [vmem:[%s7] sm:$0xff]
      %v1077 = vld [vmem:[%s7 + $0x8] sm:$0xff]
      %v1078 = vld [vmem:[%s7 + $0x10] sm:$0xff]
      %v1079 = vld [vmem:[%s7 + $0x18] sm:$0xff]
      %v1080 = vld [vmem:[%s7 + $0x20] sm:$0xff]
      %v1081 = vld [vmem:[%s7 + $0x28] sm:$0xff]
      %v1082 = vld [vmem:[%s7 + $0x30] sm:$0xff]
      %v1083 = vld [vmem:[%s7 + $0x38] sm:$0xff]
      %v1084 = vld [vmem:[%s8] sm:$0x1]
      %v1086 = vlaneseq
      %v1087 = vshrl.u32 %v1086, 7
      %v1088 = vsub.s32 0, %v1087
      %v1089 = vrot.slane %v1084, %v1088
      %v1092 = vsel %vm642, %v1060, 0
      %v1095 = vsel %vm642, %v1061, 0
      %v1098 = vsel %vm642, %v1062, 0
      %v1101 = vsel %vm642, %v1063, 0
      %v1104 = vsel %vm642, %v1064, 0
      %v1107 = vsel %vm642, %v1065, 0
      %v1110 = vsel %vm642, %v1066, 0
      %v1113 = vsel %vm642, %v1067, 0
      %v1116 = vsel %vm642, %v1068, 0
      %v1119 = vsel %vm642, %v1069, 0
      %v1122 = vsel %vm642, %v1070, 0
      %v1125 = vsel %vm642, %v1071, 0
      %v1128 = vsel %vm642, %v1072, 0
      %v1131 = vsel %vm642, %v1073, 0
      %v1134 = vsel %vm642, %v1074, 0
      %v1137 = vsel %vm642, %v1075, 0
      %1139 = vmatprep.subr.mxu0 0.0
      %1140 = vmatpush1.msra.mxu0 0.0
      %1141 = vmatprep.subr.mxu0 0.0
      %1142 = vmatpush1.msra.mxu0 0.0
      %1143 = vmatprep.subr.mxu0 0.0
      %1144 = vmatpush1.msra.mxu0 0.0
      %1145 = vmatprep.subr.mxu0 0.0
      %1146 = vmatpush1.msra.mxu0 0.0
      %1147 = vmatprep.subr.mxu0 0.0
      %1148 = vmatpush1.msra.mxu0 0.0
      %1149 = vmatprep.subr.mxu0 0.0
      %1150 = vmatpush1.msra.mxu0 0.0
      %1151 = vmatprep.subr.mxu0 0.0
      %1152 = vmatpush1.msra.mxu0 0.0
      %1153 = vmatprep.subr.mxu0 0.0
      %1154 = vmatpush1.msra.mxu0 0.0
      %1155 = vmatprep.subr.mxu0 0.0
      %1156 = vmatpush1.msra.mxu0 %v1083
      %1157 = vmatprep.subr.mxu0 0.0
      %1158 = vmatpush1.msra.mxu0 %v1082
      %1159 = vmatprep.subr.mxu0 0.0
      %1160 = vmatpush1.msra.mxu0 %v1081
      %1161 = vmatprep.subr.mxu0 0.0
      %1162 = vmatpush1.msra.mxu0 %v1080
      %1163 = vmatprep.subr.mxu0 0.0
      %1164 = vmatpush1.msra.mxu0 %v1079
      %1165 = vmatprep.subr.mxu0 0.0
      %1166 = vmatpush1.msra.mxu0 %v1078
      %1167 = vmatprep.subr.mxu0 0.0
      %1168 = vmatpush1.msra.mxu0 %v1077
      %1169 = vmatprep.subr.mxu0 0.0
      %1170 = vmatpush1.msra.mxu0 %v1076
      %1171 = vmatprep.subr.mxu0 0.0
      %1172 = vmatpush2.msra.mxu0 0.0
      %1173 = vmatprep.subr.mxu0 0.0
      %1174 = vmatpush2.msra.mxu0 0.0
      %1175 = vmatprep.subr.mxu0 0.0
      %1176 = vmatpush2.msra.mxu0 0.0
      %1177 = vmatprep.subr.mxu0 0.0
      %1178 = vmatpush2.msra.mxu0 0.0
      %1179 = vmatprep.subr.mxu0 0.0
      %1180 = vmatpush2.msra.mxu0 0.0
      %1181 = vmatprep.subr.mxu0 0.0
      %1182 = vmatpush2.msra.mxu0 0.0
      %1183 = vmatprep.subr.mxu0 0.0
      %1184 = vmatpush2.msra.mxu0 0.0
      %1185 = vmatprep.subr.mxu0 0.0
      %1186 = vmatpush2.msra.mxu0 0.0
      %1187 = vmatprep.subr.mxu0 0.0
      %1188 = vmatpush2.msra.mxu0 0.0
      %1189 = vmatprep.subr.mxu0 0.0
      %1190 = vmatpush2.msra.mxu0 0.0
      %1191 = vmatprep.subr.mxu0 0.0
      %1192 = vmatpush2.msra.mxu0 0.0
      %1193 = vmatprep.subr.mxu0 0.0
      %1194 = vmatpush2.msra.mxu0 0.0
      %1195 = vmatprep.subr.mxu0 0.0
      %1196 = vmatpush2.msra.mxu0 0.0
      %1197 = vmatprep.subr.mxu0 0.0
      %1198 = vmatpush2.msra.mxu0 0.0
      %1199 = vmatprep.subr.mxu0 0.0
      %1200 = vmatpush2.msra.mxu0 0.0
      %1201 = vmatprep.subr.mxu0 0.0
      %1202 = vmatpush2.msra.mxu0 0.0
      %1203 = vmatprep.mubr.f32.mxu0 0.0
      %1204 = vmatmul.mubr.f32.gmra.mxu0 %v1092
      %v1205 = vpop.f32.mrf.mxu0
      %v1206 = vadd.f32 %v1089, %v1205
      %v1207 = vpop.f32.mrf.mxu0
      %1208 = vmatprep.mubr.f32.mxu0 0.0
      %1209 = vmatmul.mubr.f32.gmra.mxu0 %v1095
      %v1210 = vpop.f32.mrf.mxu0
      %v1211 = vadd.f32 %v1089, %v1210
      %v1212 = vpop.f32.mrf.mxu0
      %1213 = vmatprep.mubr.f32.mxu0 0.0
      %1214 = vmatmul.mubr.f32.gmra.mxu0 %v1098
      %v1215 = vpop.f32.mrf.mxu0
      %v1216 = vadd.f32 %v1089, %v1215
      %v1217 = vpop.f32.mrf.mxu0
      %1218 = vmatprep.mubr.f32.mxu0 0.0
      %1219 = vmatmul.mubr.f32.gmra.mxu0 %v1101
      %v1220 = vpop.f32.mrf.mxu0
      %v1221 = vadd.f32 %v1089, %v1220
      %v1222 = vpop.f32.mrf.mxu0
      %1223 = vmatprep.mubr.f32.mxu0 0.0
      %1224 = vmatmul.mubr.f32.gmra.mxu0 %v1104
      %v1225 = vpop.f32.mrf.mxu0
      %v1226 = vadd.f32 %v1089, %v1225
      %v1227 = vpop.f32.mrf.mxu0
      %1228 = vmatprep.mubr.f32.mxu0 0.0
      %1229 = vmatmul.mubr.f32.gmra.mxu0 %v1107
      %v1230 = vpop.f32.mrf.mxu0
      %v1231 = vadd.f32 %v1089, %v1230
      %v1232 = vpop.f32.mrf.mxu0
      %1233 = vmatprep.mubr.f32.mxu0 0.0
      %1234 = vmatmul.mubr.f32.gmra.mxu0 %v1110
      %v1235 = vpop.f32.mrf.mxu0
      %v1236 = vadd.f32 %v1089, %v1235
      %v1237 = vpop.f32.mrf.mxu0
      %1238 = vmatprep.mubr.f32.mxu0 0.0
      %1239 = vmatmul.mubr.f32.gmra.mxu0 %v1113
      %v1240 = vpop.f32.mrf.mxu0
      %v1241 = vadd.f32 %v1089, %v1240
      %v1242 = vpop.f32.mrf.mxu0
      %1243 = vmatprep.mubr.f32.mxu0 0.0
      %1244 = vmatmul.mubr.f32.gmra.mxu0 %v1116
      %v1245 = vpop.f32.mrf.mxu0
      %v1246 = vadd.f32 %v1089, %v1245
      %v1247 = vpop.f32.mrf.mxu0
      %1248 = vmatprep.mubr.f32.mxu0 0.0
      %1249 = vmatmul.mubr.f32.gmra.mxu0 %v1119
      %v1250 = vpop.f32.mrf.mxu0
      %v1251 = vadd.f32 %v1089, %v1250
      %v1252 = vpop.f32.mrf.mxu0
      %1253 = vmatprep.mubr.f32.mxu0 0.0
      %1254 = vmatmul.mubr.f32.gmra.mxu0 %v1122
      %v1255 = vpop.f32.mrf.mxu0
      %v1256 = vadd.f32 %v1089, %v1255
      %v1257 = vpop.f32.mrf.mxu0
      %1258 = vmatprep.mubr.f32.mxu0 0.0
      %1259 = vmatmul.mubr.f32.gmra.mxu0 %v1125
      %v1260 = vpop.f32.mrf.mxu0
      %v1261 = vadd.f32 %v1089, %v1260
      %v1262 = vpop.f32.mrf.mxu0
      %1263 = vmatprep.mubr.f32.mxu0 0.0
      %1264 = vmatmul.mubr.f32.gmra.mxu0 %v1128
      %v1265 = vpop.f32.mrf.mxu0
      %v1266 = vadd.f32 %v1089, %v1265
      %v1267 = vpop.f32.mrf.mxu0
      %1268 = vmatprep.mubr.f32.mxu0 0.0
      %1269 = vmatmul.mubr.f32.gmra.mxu0 %v1131
      %v1270 = vpop.f32.mrf.mxu0
      %v1271 = vadd.f32 %v1089, %v1270
      %v1272 = vpop.f32.mrf.mxu0
      %1273 = vmatprep.mubr.f32.mxu0 0.0
      %1274 = vmatmul.mubr.f32.gmra.mxu0 %v1134
      %v1275 = vpop.f32.mrf.mxu0
      %v1276 = vadd.f32 %v1089, %v1275
      %v1277 = vpop.f32.mrf.mxu0
      %1278 = vmatprep.mubr.f32.mxu0 0.0
      %1279 = vmatmul.mubr.f32.gmra.mxu0 %v1137
      %v1280 = vpop.f32.mrf.mxu0
      %v1281 = vadd.f32 %v1089, %v1280
      %v1282 = vpop.f32.mrf.mxu0
      %1283 = vdwg.mxu0
      %v1284 = vmax.f32 %v1206, 0.0
      %v1285 = vmax.f32 %v1211, 0.0
      %v1286 = vmax.f32 %v1216, 0.0
      %v1287 = vmax.f32 %v1221, 0.0
      %v1288 = vmax.f32 %v1226, 0.0
      %v1289 = vmax.f32 %v1231, 0.0
      %v1290 = vmax.f32 %v1236, 0.0
      %v1291 = vmax.f32 %v1241, 0.0
      %v1292 = vmax.f32 %v1246, 0.0
      %v1293 = vmax.f32 %v1251, 0.0
      %v1294 = vmax.f32 %v1256, 0.0
      %v1295 = vmax.f32 %v1261, 0.0
      %v1296 = vmax.f32 %v1266, 0.0
      %v1297 = vmax.f32 %v1271, 0.0
      %v1298 = vmax.f32 %v1276, 0.0
      %v1299 = vmax.f32 %v1281, 0.0
      %v1300 = vld [vmem:[%s9] sm:$0xff]
      %v1301 = vld [vmem:[%s9 + $0x8] sm:$0xff]
      %v1302 = vld [vmem:[%s9 + $0x10] sm:$0xff]
      %v1303 = vld [vmem:[%s9 + $0x18] sm:$0xff]
      %v1304 = vld [vmem:[%s9 + $0x20] sm:$0xff]
      %v1305 = vld [vmem:[%s9 + $0x28] sm:$0xff]
      %v1306 = vld [vmem:[%s9 + $0x30] sm:$0xff]
      %v1307 = vld [vmem:[%s9 + $0x38] sm:$0xff]
      %v1308 = vld [vmem:[%s10] sm:$0x1]
      %v1310 = vlaneseq
      %v1311 = vshrl.u32 %v1310, 7
      %v1312 = vsub.s32 0, %v1311
      %v1313 = vrot.slane %v1308, %v1312
      %v1316 = vsel %vm642, %v1284, 0
      %v1319 = vsel %vm642, %v1285, 0
      %v1322 = vsel %vm642, %v1286, 0
      %v1325 = vsel %vm642, %v1287, 0
      %v1328 = vsel %vm642, %v1288, 0
      %v1331 = vsel %vm642, %v1289, 0
      %v1334 = vsel %vm642, %v1290, 0
      %v1337 = vsel %vm642, %v1291, 0
      %v1340 = vsel %vm642, %v1292, 0
      %v1343 = vsel %vm642, %v1293, 0
      %v1346 = vsel %vm642, %v1294, 0
      %v1349 = vsel %vm642, %v1295, 0
      %v1352 = vsel %vm642, %v1296, 0
      %v1355 = vsel %vm642, %v1297, 0
      %v1358 = vsel %vm642, %v1298, 0
      %v1361 = vsel %vm642, %v1299, 0
      %1363 = vmatprep.subr.mxu0 0.0
      %1364 = vmatpush1.msra.mxu0 0.0
      %1365 = vmatprep.subr.mxu0 0.0
      %1366 = vmatpush1.msra.mxu0 0.0
      %1367 = vmatprep.subr.mxu0 0.0
      %1368 = vmatpush1.msra.mxu0 0.0
      %1369 = vmatprep.subr.mxu0 0.0
      %1370 = vmatpush1.msra.mxu0 0.0
      %1371 = vmatprep.subr.mxu0 0.0
      %1372 = vmatpush1.msra.mxu0 0.0
      %1373 = vmatprep.subr.mxu0 0.0
      %1374 = vmatpush1.msra.mxu0 0.0
      %1375 = vmatprep.subr.mxu0 0.0
      %1376 = vmatpush1.msra.mxu0 0.0
      %1377 = vmatprep.subr.mxu0 0.0
      %1378 = vmatpush1.msra.mxu0 0.0
      %1379 = vmatprep.subr.mxu0 0.0
      %1380 = vmatpush1.msra.mxu0 %v1307
      %1381 = vmatprep.subr.mxu0 0.0
      %1382 = vmatpush1.msra.mxu0 %v1306
      %1383 = vmatprep.subr.mxu0 0.0
      %1384 = vmatpush1.msra.mxu0 %v1305
      %1385 = vmatprep.subr.mxu0 0.0
      %1386 = vmatpush1.msra.mxu0 %v1304
      %1387 = vmatprep.subr.mxu0 0.0
      %1388 = vmatpush1.msra.mxu0 %v1303
      %1389 = vmatprep.subr.mxu0 0.0
      %1390 = vmatpush1.msra.mxu0 %v1302
      %1391 = vmatprep.subr.mxu0 0.0
      %1392 = vmatpush1.msra.mxu0 %v1301
      %1393 = vmatprep.subr.mxu0 0.0
      %1394 = vmatpush1.msra.mxu0 %v1300
      %1395 = vmatprep.subr.mxu0 0.0
      %1396 = vmatpush2.msra.mxu0 0.0
      %1397 = vmatprep.subr.mxu0 0.0
      %1398 = vmatpush2.msra.mxu0 0.0
      %1399 = vmatprep.subr.mxu0 0.0
      %1400 = vmatpush2.msra.mxu0 0.0
      %1401 = vmatprep.subr.mxu0 0.0
      %1402 = vmatpush2.msra.mxu0 0.0
      %1403 = vmatprep.subr.mxu0 0.0
      %1404 = vmatpush2.msra.mxu0 0.0
      %1405 = vmatprep.subr.mxu0 0.0
      %1406 = vmatpush2.msra.mxu0 0.0
      %1407 = vmatprep.subr.mxu0 0.0
      %1408 = vmatpush2.msra.mxu0 0.0
      %1409 = vmatprep.subr.mxu0 0.0
      %1410 = vmatpush2.msra.mxu0 0.0
      %1411 = vmatprep.subr.mxu0 0.0
      %1412 = vmatpush2.msra.mxu0 0.0
      %1413 = vmatprep.subr.mxu0 0.0
      %1414 = vmatpush2.msra.mxu0 0.0
      %1415 = vmatprep.subr.mxu0 0.0
      %1416 = vmatpush2.msra.mxu0 0.0
      %1417 = vmatprep.subr.mxu0 0.0
      %1418 = vmatpush2.msra.mxu0 0.0
      %1419 = vmatprep.subr.mxu0 0.0
      %1420 = vmatpush2.msra.mxu0 0.0
      %1421 = vmatprep.subr.mxu0 0.0
      %1422 = vmatpush2.msra.mxu0 0.0
      %1423 = vmatprep.subr.mxu0 0.0
      %1424 = vmatpush2.msra.mxu0 0.0
      %1425 = vmatprep.subr.mxu0 0.0
      %1426 = vmatpush2.msra.mxu0 0.0
      %1427 = vmatprep.mubr.f32.mxu0 0.0
      %1428 = vmatmul.mubr.f32.gmra.mxu0 %v1316
      %v1429 = vpop.f32.mrf.mxu0
      %v1430 = vadd.f32 %v1313, %v1429
      %v1431 = vpop.f32.mrf.mxu0
      %1432 = vmatprep.mubr.f32.mxu0 0.0
      %1433 = vmatmul.mubr.f32.gmra.mxu0 %v1319
      %v1434 = vpop.f32.mrf.mxu0
      %v1435 = vadd.f32 %v1313, %v1434
      %v1436 = vpop.f32.mrf.mxu0
      %1437 = vmatprep.mubr.f32.mxu0 0.0
      %1438 = vmatmul.mubr.f32.gmra.mxu0 %v1322
      %v1439 = vpop.f32.mrf.mxu0
      %v1440 = vadd.f32 %v1313, %v1439
      %v1441 = vpop.f32.mrf.mxu0
      %1442 = vmatprep.mubr.f32.mxu0 0.0
      %1443 = vmatmul.mubr.f32.gmra.mxu0 %v1325
      %v1444 = vpop.f32.mrf.mxu0
      %v1445 = vadd.f32 %v1313, %v1444
      %v1446 = vpop.f32.mrf.mxu0
      %1447 = vmatprep.mubr.f32.mxu0 0.0
      %1448 = vmatmul.mubr.f32.gmra.mxu0 %v1328
      %v1449 = vpop.f32.mrf.mxu0
      %v1450 = vadd.f32 %v1313, %v1449
      %v1451 = vpop.f32.mrf.mxu0
      %1452 = vmatprep.mubr.f32.mxu0 0.0
      %1453 = vmatmul.mubr.f32.gmra.mxu0 %v1331
      %v1454 = vpop.f32.mrf.mxu0
      %v1455 = vadd.f32 %v1313, %v1454
      %v1456 = vpop.f32.mrf.mxu0
      %1457 = vmatprep.mubr.f32.mxu0 0.0
      %1458 = vmatmul.mubr.f32.gmra.mxu0 %v1334
      %v1459 = vpop.f32.mrf.mxu0
      %v1460 = vadd.f32 %v1313, %v1459
      %v1461 = vpop.f32.mrf.mxu0
      %1462 = vmatprep.mubr.f32.mxu0 0.0
      %1463 = vmatmul.mubr.f32.gmra.mxu0 %v1337
      %v1464 = vpop.f32.mrf.mxu0
      %v1465 = vadd.f32 %v1313, %v1464
      %v1466 = vpop.f32.mrf.mxu0
      %1467 = vmatprep.mubr.f32.mxu0 0.0
      %1468 = vmatmul.mubr.f32.gmra.mxu0 %v1340
      %v1469 = vpop.f32.mrf.mxu0
      %v1470 = vadd.f32 %v1313, %v1469
      %v1471 = vpop.f32.mrf.mxu0
      %1472 = vmatprep.mubr.f32.mxu0 0.0
      %1473 = vmatmul.mubr.f32.gmra.mxu0 %v1343
      %v1474 = vpop.f32.mrf.mxu0
      %v1475 = vadd.f32 %v1313, %v1474
      %v1476 = vpop.f32.mrf.mxu0
      %1477 = vmatprep.mubr.f32.mxu0 0.0
      %1478 = vmatmul.mubr.f32.gmra.mxu0 %v1346
      %v1479 = vpop.f32.mrf.mxu0
      %v1480 = vadd.f32 %v1313, %v1479
      %v1481 = vpop.f32.mrf.mxu0
      %1482 = vmatprep.mubr.f32.mxu0 0.0
      %1483 = vmatmul.mubr.f32.gmra.mxu0 %v1349
      %v1484 = vpop.f32.mrf.mxu0
      %v1485 = vadd.f32 %v1313, %v1484
      %v1486 = vpop.f32.mrf.mxu0
      %1487 = vmatprep.mubr.f32.mxu0 0.0
      %1488 = vmatmul.mubr.f32.gmra.mxu0 %v1352
      %v1489 = vpop.f32.mrf.mxu0
      %v1490 = vadd.f32 %v1313, %v1489
      %v1491 = vpop.f32.mrf.mxu0
      %1492 = vmatprep.mubr.f32.mxu0 0.0
      %1493 = vmatmul.mubr.f32.gmra.mxu0 %v1355
      %v1494 = vpop.f32.mrf.mxu0
      %v1495 = vadd.f32 %v1313, %v1494
      %v1496 = vpop.f32.mrf.mxu0
      %1497 = vmatprep.mubr.f32.mxu0 0.0
      %1498 = vmatmul.mubr.f32.gmra.mxu0 %v1358
      %v1499 = vpop.f32.mrf.mxu0
      %v1500 = vadd.f32 %v1313, %v1499
      %v1501 = vpop.f32.mrf.mxu0
      %1502 = vmatprep.mubr.f32.mxu0 0.0
      %1503 = vmatmul.mubr.f32.gmra.mxu0 %v1361
      %v1504 = vpop.f32.mrf.mxu0
      %v1505 = vadd.f32 %v1313, %v1504
      %v1506 = vpop.f32.mrf.mxu0
      %1507 = vdwg.mxu0
      %1508 = vst [vmem:[%s388] sm:$0xff] %v1430
      %1509 = vst [vmem:[%s388 + $0x8] sm:$0xff] %v1435
      %1510 = vst [vmem:[%s388 + $0x10] sm:$0xff] %v1440
      %1511 = vst [vmem:[%s388 + $0x18] sm:$0xff] %v1445
      %1512 = vst [vmem:[%s388 + $0x20] sm:$0xff] %v1450
      %1513 = vst [vmem:[%s388 + $0x28] sm:$0xff] %v1455
      %1514 = vst [vmem:[%s388 + $0x30] sm:$0xff] %v1460
      %1515 = vst [vmem:[%s388 + $0x38] sm:$0xff] %v1465
      %1516 = vst [vmem:[%s388 + $0x40] sm:$0xff] %v1470
      %1517 = vst [vmem:[%s388 + $0x48] sm:$0xff] %v1475
      %1518 = vst [vmem:[%s388 + $0x50] sm:$0xff] %v1480
      %1519 = vst [vmem:[%s388 + $0x58] sm:$0xff] %v1485
      %1520 = vst [vmem:[%s388 + $0x60] sm:$0xff] %v1490
      %1521 = vst [vmem:[%s388 + $0x68] sm:$0xff] %v1495
      %1522 = vst [vmem:[%s388 + $0x70] sm:$0xff] %v1500
      %1523 = vst [vmem:[%s388 + $0x78] sm:$0xff] %v1505
      %s1524 = smul.u32 16, %s22
      %p1525 = scmp.lt.s32.totalorder %s1524, 63
      %s1526 = scalar_select %p1525, %s1524, 63
      %s1527 = smul.addr %s1526, 8
      %s1528 = scalar_lea.vmem %s11, %s1527
      // Predicated region
      $region65: #{vae_encoder_forward.1} parent=63 // pred_check
        %p1529 = pneg %p276
      $region66: #{vae_encoder_forward.1} parent=63 // pred_check_branch
        %1531 = sbr.rel (%p1529) target = $region68
      $region67: #{vae_encoder_forward.1} parent=63 // pred_region
        %s1532 = smul.u32 16, %s22
      $region68: #{vae_encoder_forward.1} parent=63 // pred_fallthru
        _
    $region64: #{vae_encoder_forward.1} parent=5 // pred_fallthru
      _
    %p1533 = scmp.le.s32.totalorder 2, %s17
    // Predicated region
    $region69: #{vae_encoder_forward.1} parent=5 // pred_check
      %p1534 = pneg %p1533
    $region70: #{vae_encoder_forward.1} parent=5 // pred_check_branch
      %1536 = sbr.rel (%p1534) target = $region72
    $region71: #{vae_encoder_forward.1} parent=5 // pred_region
      %s1537 = ssub.s32 %s17, 2
      // Predicated region
      $region73: #{vae_encoder_forward.1} parent=71 // pred_check
        %p1538 = pneg %p282
      $region74: #{vae_encoder_forward.1} parent=71 // pred_check_branch
        %1540 = sbr.rel (%p1538) target = $region76
      $region75: #{vae_encoder_forward.1} parent=71 // pred_region
        %s1541 = smul.u32 16, %s23
        %p1542 = scmp.lt.s32.totalorder %s1541, 63
        %s1543 = scalar_select %p1542, %s1541, 63
        %s1544 = smul.addr %s1543, 8
        %s1545 = scalar_lea.vmem %s11, %s1544
      $region76: #{vae_encoder_forward.1} parent=71 // pred_fallthru
        _
    $region72: #{vae_encoder_forward.1} parent=5 // pred_fallthru
      _
  $region6: #{vae_encoder_forward.1} parent=0 // loop_footer
    %s21 = sadd.s32 1, %s17
  $region7: #{vae_encoder_forward.1} parent=0 // loop_footer_branch
    %16 = sbr.rel target = $region3
  $region8: #{vae_encoder_forward.1} parent=0 // loop_exit
    _

</llo_original>
